<compile_context>
chip_gen: v7x
topology: tpu7x:2x2x1
jax: 0.10.0
libtpu: 0.0.40
codegen_flags: <defaults>
</compile_context>

<pallas_src>
import jax
import jax.numpy as jnp
from jax.experimental import pallas as pl
from jax.experimental.pallas import tpu as pltpu


def _make_rvq_kernel(codebook_resident: bool, with_distances: bool, mxu_bf16: bool):
    """Build the kernel with the static configuration baked in."""

    def kernel(x_ref, cb_ref, esq_ref, *rest):
        if with_distances:
            xq_ref, loss_ref, idx_ref, dist_ref, res_scr, xsq_scr = rest
        else:
            xq_ref, loss_ref, idx_ref, res_scr, xsq_scr = rest
            dist_ref = None

        l = pl.program_id(1)
        num_levels = pl.num_programs(1)

        # ---- level 0: (re)initialize per-batch-tile carried state ----
        @pl.when(l == 0)
        def _init():
            r0 = x_ref[...].astype(jnp.float32)
            res_scr[...] = r0
            xsq_scr[...] = jnp.sum(r0 * r0, axis=1, keepdims=True)
            loss_ref[...] = jnp.zeros_like(loss_ref)

        residual = res_scr[...]            # (TB, D)  f32, carried across levels
        x_sq = xsq_scr[...]                # (TB, 1)  f32, ||residual||^2 per row

        if codebook_resident:
            cb = cb_ref[l]                 # (n_e, D) VMEM-resident, indexed per level
            e_sq = esq_ref[l]              # (1, n_e)
        else:
            cb = cb_ref[0]                 # streamed (1, n_e, D) block for level l
            e_sq = esq_ref[0]
        n_e = cb.shape[0]

        # Expanded-form squared distances; cross term on the MXU.
        if mxu_bf16:
            # ~3x MXU throughput on v6e/v7x; can flip argmin on near-ties.
            cross = jax.lax.dot_general(
                residual.astype(jnp.bfloat16), cb.astype(jnp.bfloat16),
                dimension_numbers=(((1,), (1,)), ((), ())),
                preferred_element_type=jnp.float32)
        else:
            cross = jax.lax.dot_general(
                residual, cb,
                dimension_numbers=(((1,), (1,)), ((), ())),
                preferred_element_type=jnp.float32,
                precision=jax.lax.Precision.HIGHEST)
        d = x_sq + e_sq - 2.0 * cross                        # (TB, n_e)

        # argmin over codes (first occurrence), kept 2D for TPU-friendly layout.
        dmin = jnp.min(d, axis=-1, keepdims=True)            # (TB, 1)
        code_iota = jax.lax.broadcasted_iota(jnp.int32, d.shape, 1)
        idx_2d = jnp.min(jnp.where(d == dmin, code_iota, n_e),
                         axis=-1, keepdims=True)             # (TB, 1) int32

        # Gather quantized vectors via one-hot matmul (MXU, exact f32 gather).
        onehot = (code_iota == idx_2d).astype(jnp.float32)   # (TB, n_e)
        x_res = jax.lax.dot_general(
            onehot, cb,
            dimension_numbers=(((1,), (0,)), ((), ())),
            preferred_element_type=jnp.float32,
            precision=jax.lax.Precision.HIGHEST)             # (TB, D)

        # Residual update. Its squared norm is both next level's ||r||^2 and this
        # level's loss: (x_res - r)^2 == new_residual^2.
        new_res = residual - x_res
        new_xsq = jnp.sum(new_res * new_res, axis=1, keepdims=True)   # (TB, 1)
        res_scr[...] = new_res
        xsq_scr[...] = new_xsq
        loss_ref[...] = loss_ref[...] + new_xsq

        # Indices: tiny (TB, L) block revisited across levels. L is small (<= ~16),
        # so the masked select costs a couple of vregs per level; a dense lane-offset
        # store is not worth the layout gymnastics.  Every column is written exactly
        # once (at its own level) before the block's HBM writeback, so no zero-init.
        tb, n_lvls = idx_ref.shape
        lvl = jax.lax.broadcasted_iota(jnp.int32, (tb, n_lvls), 1)
        idx_ref[...] = jnp.where(lvl == l,
                                 jnp.broadcast_to(idx_2d, (tb, n_lvls)),
                                 idx_ref[...])

        # Distances: per-level dense (TB, n_e) block in the (B, L*n_e)-flattened
        # output -> one unmasked lane-dense store per level, no RMW, no init.
        if with_distances:
            dist_ref[...] = d

        # x_q == x - final_residual; write once at the last level.
        @pl.when(l == num_levels - 1)
        def _final():
            xq_ref[...] = (x_ref[...].astype(jnp.float32) - new_res).astype(xq_ref.dtype)

    return kernel


def _round_up(a: int, m: int) -> int:
    return ((a + m - 1) // m) * m


def _vmem_bytes_estimate(TB, D, n_e, L, resident):
    lane, f32 = 128, 4
    rl = lambda v: _round_up(v, lane)
    rows = _round_up(TB, 8)
    est = 0
    est += 2 * 2 * rows * rl(D) * f32          # x in + x_q out, double buffered
    est += 2 * rows * rl(n_e) * f32            # per-level distances block, double buffered
    est += 2 * 2 * rows * lane * f32           # loss + indices blocks (lane padded)
    est += rows * (rl(D) + lane) * f32         # residual + ||r||^2 scratch
    est += 8 * rows * rl(n_e) * f32            # live (TB, n_e) temporaries (generous)
    cb_bytes = _round_up(n_e, 8) * rl(D) * f32 + 8 * rl(n_e) * f32
    est += (2 * L * cb_bytes) if resident else (3 * cb_bytes)
    return est


def residual_vq_forward(x, codebooks, beta=0.25, tile_b=256,
                        with_distances=True, mxu_bf16=False):
    """x: (B, e_dim) f32, codebooks: (L, n_e, e_dim) f32.

    Returns (x_q, mean_loss, indices, distances) matching the PyTorch forward
    (distances is None when with_distances=False).
    """
    B, D = x.shape
    L, n_e, D2 = codebooks.shape
    assert D2 == D, "codebook e_dim mismatch"

    x = x.astype(jnp.float32)
    codebooks = codebooks.astype(jnp.float32)
    # Codebook squared norms are constant over the whole forward; compute once here.
    e_sq = jnp.sum(codebooks * codebooks, axis=-1)[:, None, :]    # (L, 1, n_e)

    # ---- batch tiling: pad B to a multiple of TB; keep >= 2 tiles when B allows it
    #      (megacore sharding on v7x), never fall back to one giant tile. ----
    TB = max(8, min(tile_b, _round_up(B, 8)))
    if _round_up(B, 8) > 8 and _round_up(B, TB) // TB < 2:
        TB = max(8, _round_up((B + 1) // 2, 8))
    Bp = _round_up(B, TB)
    x_in = jnp.pad(x, ((0, Bp - B), (0, 0))) if Bp != B else x
    num_tiles = Bp // TB

    # ---- codebook residency: single DMA for the whole call when it fits VMEM. ----
    cb_bytes = L * n_e * (D + 1) * 4
    codebook_resident = (2 * cb_bytes) <= (12 << 20)
    if codebook_resident:
        cb_spec = pl.BlockSpec((L, n_e, D), lambda b, l: (0, 0, 0))
        esq_spec = pl.BlockSpec((L, 1, n_e), lambda b, l: (0, 0, 0))
    else:
        # Streamed per level; 3-deep pipeline hides the per-level DMA when compute
        # per level is short.
        cb_spec = pl.BlockSpec((1, n_e, D), lambda b, l: (l, 0, 0),
                               pipeline_mode=pl.Buffered(3))
        esq_spec = pl.BlockSpec((1, 1, n_e), lambda b, l: (l, 0, 0),
                                pipeline_mode=pl.Buffered(3))

    out_specs = [
        pl.BlockSpec((TB, D), lambda b, l: (b, 0)),      # x_q (written at last level)
        pl.BlockSpec((TB, 1), lambda b, l: (b, 0)),      # per-row loss sum over levels
        pl.BlockSpec((TB, L), lambda b, l: (b, 0)),      # indices
    ]
    out_shapes = [
        jax.ShapeDtypeStruct((Bp, D), jnp.float32),
        jax.ShapeDtypeStruct((Bp, 1), jnp.float32),
        jax.ShapeDtypeStruct((Bp, L), jnp.int32),
    ]
    if with_distances:
        # Flattened (B, L*n_e) layout: per-level (TB, n_e) blocks are dense lane-wise;
        # wrapper reshape to (B, L, n_e) is free (row-major).
        out_specs.append(pl.BlockSpec((TB, n_e), lambda b, l: (b, l)))
        out_shapes.append(jax.ShapeDtypeStruct((Bp, L * n_e), jnp.float32))

    est = _vmem_bytes_estimate(TB, D, n_e, L, codebook_resident)
    vmem_limit = int(min(max(2 * est, 32 << 20), 60 << 20))

    kernel = _make_rvq_kernel(codebook_resident, with_distances, mxu_bf16)

    outs = pl.pallas_call(
        kernel,
        grid_spec=pltpu.PrefetchScalarGridSpec(
            num_scalar_prefetch=0,
            grid=(num_tiles, L),
            in_specs=[
                pl.BlockSpec((TB, D), lambda b, l: (b, 0)),   # x (batch tile)
                cb_spec,                                       # codebooks
                esq_spec,                                      # ||e||^2
            ],
            out_specs=out_specs,
            scratch_shapes=[
                pltpu.VMEM((TB, D), jnp.float32),   # residual carried across levels
                pltpu.VMEM((TB, 1), jnp.float32),   # ||residual||^2 per row
            ],
        ),
        out_shape=tuple(out_shapes),
        compiler_params=pltpu.CompilerParams(
            dimension_semantics=("parallel", "arbitrary"),
            vmem_limit_bytes=vmem_limit),
    )(x_in, codebooks, e_sq)

    if with_distances:
        x_q, loss_rows, indices, dist_flat = outs
        distances = dist_flat.reshape(Bp, L, n_e)[:B]
    else:
        x_q, loss_rows, indices = outs
        distances = None

    # loss_l = (1+beta) * mean(new_residual_l^2); mean over levels (padded rows excluded).
    mean_loss = (1.0 + beta) * jnp.sum(loss_rows[:B]) / (L * B * D)
    return x_q[:B], mean_loss, indices[:B], distances


def rvq_reference(x, codebooks, beta=0.25):
    """Pure-JAX reference mirroring the PyTorch module's forward (use_sk path disabled)."""
    residual = x
    x_q = jnp.zeros_like(x)
    losses, idxs, dists = [], [], []
    for l in range(codebooks.shape[0]):
        cb = codebooks[l]
        d = (jnp.sum(residual ** 2, axis=1, keepdims=True)
             + jnp.sum(cb ** 2, axis=1)[None, :]
             - 2.0 * jnp.matmul(residual, cb.T, precision=jax.lax.Precision.HIGHEST))
        idx = jnp.argmin(d, axis=-1)
        x_res = cb[idx]
        losses.append((1.0 + beta) * jnp.mean((x_res - residual) ** 2))
        idxs.append(idx.astype(jnp.int32))
        dists.append(d)
        residual = residual - x_res
        x_q = x_q + x_res
    return (x_q,
            jnp.mean(jnp.stack(losses)),
            jnp.stack(idxs, axis=-1),
            jnp.stack(dists, axis=1))


if __name__ == "__main__":
    # Small config exercising batch tiling AND padding: B=52 -> TB=32, 2 tiles, 12 padded rows.
    B, e_dim = 52, 64
    n_e_list = [128, 128, 128]
    sk_epsilons = [0.0, 0.0, 0.0]   # sk disabled -> argmin assignment path
    beta = 0.25
    L = len(n_e_list)

    key = jax.random.PRNGKey(0)
    kx, kc = jax.random.split(key)
    x = jax.random.normal(kx, (B, e_dim), dtype=jnp.float32)
    # Deterministic synthetic codebooks (stand-in for nn.Embedding weights).
    codebooks = 0.5 * jax.random.normal(kc, (L, n_e_list[0], e_dim), dtype=jnp.float32)

    out = residual_vq_forward(x, codebooks, beta=beta)
    out = jax.block_until_ready(out)
    x_q, mean_loss, indices, distances = out

    # Sanity-check against the pure-JAX reference.
    rx_q, rloss, ridx, rdist = rvq_reference(x, codebooks, beta=beta)
    assert indices.shape == (B, L) and distances.shape == (B, L, n_e_list[0])
    assert jnp.array_equal(indices, ridx), "indices mismatch"
    assert jnp.allclose(x_q, rx_q, atol=1e-4, rtol=1e-4), "x_q mismatch"
    assert jnp.allclose(mean_loss, rloss, atol=1e-4, rtol=1e-4), "loss mismatch"
    assert jnp.allclose(distances, rdist, atol=1e-3, rtol=1e-3), "distance mismatch"

    print("KERNEL_OK")
</pallas_src>

<mosaic_0001>
module attributes {stable_mosaic.version = 11 : i64} {
  func.func @kernel(%arg0: i32, %arg1: i32, %arg2: memref<32x64xf32, #tpu.memory_space<vmem>>, %arg3: memref<3x128x64xf32, #tpu.memory_space<vmem>>, %arg4: memref<3x1x128xf32, #tpu.memory_space<vmem>>, %arg5: memref<32x64xf32, #tpu.memory_space<vmem>>, %arg6: memref<32x1xf32, #tpu.memory_space<vmem>>, %arg7: memref<32x3xi32, #tpu.memory_space<vmem>>, %arg8: memref<32x128xf32, #tpu.memory_space<vmem>>, %arg9: memref<32x64xf32, #tpu.memory_space<vmem>>, %arg10: memref<32x1xf32, #tpu.memory_space<vmem>>) attributes {dimension_semantics = [#tpu.dimension_semantics<parallel>, #tpu.dimension_semantics<arbitrary>], iteration_bounds = array<i64: 2, 3>, scalar_prefetch = 0 : i64, scratch_operands = 2 : i64, tpu.core_type = #tpu.core_type<tc>, window_params = [{transform_indices = @transform_0, window_bounds = array<i64: 32, 64>}, {pipeline_mode = #tpu.pipeline_mode<synchronous>, transform_indices = @transform_1, window_bounds = array<i64: 3, 128, 64>}, {pipeline_mode = #tpu.pipeline_mode<synchronous>, transform_indices = @transform_2, window_bounds = array<i64: 3, 1, 128>}, {transform_indices = @transform_3, window_bounds = array<i64: 32, 64>}, {transform_indices = @transform_4, window_bounds = array<i64: 32, 1>}, {transform_indices = @transform_5, window_bounds = array<i64: 32, 3>}, {transform_indices = @transform_6, window_bounds = array<i64: 32, 128>}]} {
    %c0_i32 = arith.constant 0 : i32
    %0 = arith.cmpi eq, %arg1, %c0_i32 : i32
    %1 = arith.extui %0 : i1 to i32
    %c0_i32_0 = arith.constant 0 : i32
    %2 = arith.cmpi ne, %1, %c0_i32_0 : i32
    scf.if %2 {
      %c0_28 = arith.constant 0 : index
      %c0_29 = arith.constant 0 : index
      %53 = vector.load %arg2[%c0_28, %c0_29] : memref<32x64xf32, #tpu.memory_space<vmem>>, vector<32x64xf32>
      %c0_30 = arith.constant 0 : index
      %c0_31 = arith.constant 0 : index
      %54 = vector.load %arg9[%c0_30, %c0_31] : memref<32x64xf32, #tpu.memory_space<vmem>>, vector<32x64xf32>
      tpu.vector_store %arg9[%c0_30, %c0_31], %53 {strides = array<i32>} : memref<32x64xf32, #tpu.memory_space<vmem>>, vector<32x64xf32>,
      %55 = arith.mulf %53, %53 : vector<32x64xf32>
      %cst_32 = arith.constant dense<0.000000e+00> : vector<32xf32>
      %56 = vector.multi_reduction <add>, %55, %cst_32 [1] : vector<32x64xf32> to vector<32xf32>
      %57 = vector.shape_cast %56 : vector<32xf32> to vector<32x1xf32>
      %c0_33 = arith.constant 0 : index
      %c0_34 = arith.constant 0 : index
      %58 = vector.load %arg10[%c0_33, %c0_34] : memref<32x1xf32, #tpu.memory_space<vmem>>, vector<32x1xf32>
      tpu.vector_store %arg10[%c0_33, %c0_34], %57 {strides = array<i32>} : memref<32x1xf32, #tpu.memory_space<vmem>>, vector<32x1xf32>,
      %cst_35 = arith.constant 0.000000e+00 : f32
      %59 = vector.broadcast %cst_35 : f32 to vector<32x1xf32>
      %c0_36 = arith.constant 0 : index
      %c0_37 = arith.constant 0 : index
      %60 = vector.load %arg6[%c0_36, %c0_37] : memref<32x1xf32, #tpu.memory_space<vmem>>, vector<32x1xf32>
      tpu.vector_store %arg6[%c0_36, %c0_37], %59 {strides = array<i32>} : memref<32x1xf32, #tpu.memory_space<vmem>>, vector<32x1xf32>,
    } else {
    }
    %c0 = arith.constant 0 : index
    %c0_1 = arith.constant 0 : index
    %3 = vector.load %arg9[%c0, %c0_1] : memref<32x64xf32, #tpu.memory_space<vmem>>, vector<32x64xf32>
    %c0_2 = arith.constant 0 : index
    %c0_3 = arith.constant 0 : index
    %4 = vector.load %arg10[%c0_2, %c0_3] : memref<32x1xf32, #tpu.memory_space<vmem>>, vector<32x1xf32>
    %5 = arith.index_cast %arg1 : i32 to index
    %c0_4 = arith.constant 0 : index
    %c0_5 = arith.constant 0 : index
    %6 = vector.load %arg3[%5, %c0_4, %c0_5] : memref<3x128x64xf32, #tpu.memory_space<vmem>>, vector<1x128x64xf32>
    %7 = vector.shape_cast %6 : vector<1x128x64xf32> to vector<128x64xf32>
    %8 = arith.index_cast %arg1 : i32 to index
    %c0_6 = arith.constant 0 : index
    %c0_7 = arith.constant 0 : index
    %9 = vector.load %arg4[%8, %c0_6, %c0_7] : memref<3x1x128xf32, #tpu.memory_space<vmem>>, vector<1x1x128xf32>
    %10 = vector.shape_cast %9 : vector<1x1x128xf32> to vector<1x128xf32>
    %cst = arith.constant dense<0.000000e+00> : vector<32x128xf32>
    %11 = tpu.matmul %3, %7, %cst {dimension_numbers = #tpu.dot_dimension_numbers<[1], [1], [0], [0], [0, 0, 1, 0], [], []>, precision = #tpu.contract_precision<fp32>} : vector<32x64xf32>, vector<128x64xf32>, vector<32x128xf32> -> vector<32x128xf32>
    %12 = vector.broadcast %4 : vector<32x1xf32> to vector<32x128xf32>
    %13 = vector.broadcast %10 : vector<1x128xf32> to vector<32x128xf32>
    %14 = arith.addf %12, %13 : vector<32x128xf32>
    %cst_8 = arith.constant 2.000000e+00 : f32
    %15 = vector.broadcast %cst_8 : f32 to vector<32x128xf32>
    %16 = arith.mulf %15, %11 : vector<32x128xf32>
    %17 = arith.subf %14, %16 : vector<32x128xf32>
    %cst_9 = arith.constant dense<0x7F800000> : vector<32xf32>
    %18 = vector.multi_reduction <minimumf>, %17, %cst_9 [1] : vector<32x128xf32> to vector<32xf32>
    %19 = vector.shape_cast %18 : vector<32xf32> to vector<32x1xf32>
    %20 = tpu.iota {dimensions = array<i32: 1>} : vector<32x128xi32>
    %21 = vector.broadcast %19 : vector<32x1xf32> to vector<32x128xf32>
    %22 = arith.cmpf oeq, %17, %21 : vector<32x128xf32>
    %c128_i32 = arith.constant 128 : i32
    %23 = vector.broadcast %c128_i32 : i32 to vector<32x128xi32>
    %24 = arith.select %22, %20, %23 : vector<32x128xi1>, vector<32x128xi32>
    %cst_10 = arith.constant dense<2147483647> : vector<32xi32>
    %25 = vector.multi_reduction <minsi>, %24, %cst_10 [1] : vector<32x128xi32> to vector<32xi32>
    %26 = vector.shape_cast %25 : vector<32xi32> to vector<32x1xi32>
    %27 = vector.broadcast %26 : vector<32x1xi32> to vector<32x128xi32>
    %28 = arith.cmpi eq, %20, %27 : vector<32x128xi32>
    %29 = arith.extui %28 : vector<32x128xi1> to vector<32x128xi32>
    %30 = arith.sitofp %29 : vector<32x128xi32> to vector<32x128xf32>
    %cst_11 = arith.constant dense<0.000000e+00> : vector<32x64xf32>
    %31 = tpu.matmul %30, %7, %cst_11 {dimension_numbers = #tpu.dot_dimension_numbers<[1], [0], [0], [1], [0, 0, 1, 1], [], []>, precision = #tpu.contract_precision<fp32>} : vector<32x128xf32>, vector<128x64xf32>, vector<32x64xf32> -> vector<32x64xf32>
    %32 = arith.subf %3, %31 : vector<32x64xf32>
    %33 = arith.mulf %32, %32 : vector<32x64xf32>
    %cst_12 = arith.constant dense<0.000000e+00> : vector<32xf32>
    %34 = vector.multi_reduction <add>, %33, %cst_12 [1] : vector<32x64xf32> to vector<32xf32>
    %35 = vector.shape_cast %34 : vector<32xf32> to vector<32x1xf32>
    %c0_13 = arith.constant 0 : index
    %c0_14 = arith.constant 0 : index
    %36 = vector.load %arg9[%c0_13, %c0_14] : memref<32x64xf32, #tpu.memory_space<vmem>>, vector<32x64xf32>
    tpu.vector_store %arg9[%c0_13, %c0_14], %32 {strides = array<i32>} : memref<32x64xf32, #tpu.memory_space<vmem>>, vector<32x64xf32>,
    %c0_15 = arith.constant 0 : index
    %c0_16 = arith.constant 0 : index
    %37 = vector.load %arg10[%c0_15, %c0_16] : memref<32x1xf32, #tpu.memory_space<vmem>>, vector<32x1xf32>
    tpu.vector_store %arg10[%c0_15, %c0_16], %35 {strides = array<i32>} : memref<32x1xf32, #tpu.memory_space<vmem>>, vector<32x1xf32>,
    %c0_17 = arith.constant 0 : index
    %c0_18 = arith.constant 0 : index
    %38 = vector.load %arg6[%c0_17, %c0_18] : memref<32x1xf32, #tpu.memory_space<vmem>>, vector<32x1xf32>
    %39 = arith.addf %38, %35 : vector<32x1xf32>
    %c0_19 = arith.constant 0 : index
    %c0_20 = arith.constant 0 : index
    %40 = vector.load %arg6[%c0_19, %c0_20] : memref<32x1xf32, #tpu.memory_space<vmem>>, vector<32x1xf32>
    tpu.vector_store %arg6[%c0_19, %c0_20], %39 {strides = array<i32>} : memref<32x1xf32, #tpu.memory_space<vmem>>, vector<32x1xf32>,
    %41 = tpu.iota {dimensions = array<i32: 1>} : vector<32x3xi32>
    %42 = vector.broadcast %arg1 : i32 to vector<32x3xi32>
    %43 = arith.cmpi eq, %41, %42 : vector<32x3xi32>
    %44 = vector.shape_cast %26 : vector<32x1xi32> to vector<32x1xi32>
    %45 = vector.broadcast %44 : vector<32x1xi32> to vector<32x3xi32>
    %c0_21 = arith.constant 0 : index
    %c0_22 = arith.constant 0 : index
    %46 = vector.load %arg7[%c0_21, %c0_22] : memref<32x3xi32, #tpu.memory_space<vmem>>, vector<32x3xi32>
    %47 = arith.select %43, %45, %46 : vector<32x3xi1>, vector<32x3xi32>
    %c0_23 = arith.constant 0 : index
    %c0_24 = arith.constant 0 : index
    %48 = vector.load %arg7[%c0_23, %c0_24] : memref<32x3xi32, #tpu.memory_space<vmem>>, vector<32x3xi32>
    tpu.vector_store %arg7[%c0_23, %c0_24], %47 {strides = array<i32>} : memref<32x3xi32, #tpu.memory_space<vmem>>, vector<32x3xi32>,
    %c0_25 = arith.constant 0 : index
    %c0_26 = arith.constant 0 : index
    %49 = vector.load %arg8[%c0_25, %c0_26] : memref<32x128xf32, #tpu.memory_space<vmem>>, vector<32x128xf32>
    tpu.vector_store %arg8[%c0_25, %c0_26], %17 {strides = array<i32>} : memref<32x128xf32, #tpu.memory_space<vmem>>, vector<32x128xf32>,
    %c2_i32 = arith.constant 2 : i32
    %50 = arith.cmpi eq, %arg1, %c2_i32 : i32
    %51 = arith.extui %50 : i1 to i32
    %c0_i32_27 = arith.constant 0 : i32
    %52 = arith.cmpi ne, %51, %c0_i32_27 : i32
    scf.if %52 {
      %c0_28 = arith.constant 0 : index
      %c0_29 = arith.constant 0 : index
      %53 = vector.load %arg2[%c0_28, %c0_29] : memref<32x64xf32, #tpu.memory_space<vmem>>, vector<32x64xf32>
      %54 = arith.subf %53, %32 : vector<32x64xf32>
      %c0_30 = arith.constant 0 : index
      %c0_31 = arith.constant 0 : index
      %55 = vector.load %arg5[%c0_30, %c0_31] : memref<32x64xf32, #tpu.memory_space<vmem>>, vector<32x64xf32>
      tpu.vector_store %arg5[%c0_30, %c0_31], %54 {strides = array<i32>} : memref<32x64xf32, #tpu.memory_space<vmem>>, vector<32x64xf32>,
    } else {
    }
    return
  }
  func.func @transform_0(%arg0: i32, %arg1: i32) -> (i32, i32) {
    %c0_i32 = arith.constant 0 : i32
    %c0_i32_0 = arith.constant 0 : i32
    return %arg0, %c0_i32 : i32, i32
  }
  func.func @transform_1(%arg0: i32, %arg1: i32) -> (i32, i32, i32) {
    %c0_i32 = arith.constant 0 : i32
    %c0_i32_0 = arith.constant 0 : i32
    %c0_i32_1 = arith.constant 0 : i32
    %c0_i32_2 = arith.constant 0 : i32
    return %c0_i32, %c0_i32_0, %c0_i32_1 : i32, i32, i32
  }
  func.func @transform_2(%arg0: i32, %arg1: i32) -> (i32, i32, i32) {
    %c0_i32 = arith.constant 0 : i32
    %c0_i32_0 = arith.constant 0 : i32
    %c0_i32_1 = arith.constant 0 : i32
    %c0_i32_2 = arith.constant 0 : i32
    return %c0_i32, %c0_i32_0, %c0_i32_1 : i32, i32, i32
  }
  func.func @transform_3(%arg0: i32, %arg1: i32) -> (i32, i32) {
    %c0_i32 = arith.constant 0 : i32
    %c0_i32_0 = arith.constant 0 : i32
    return %arg0, %c0_i32 : i32, i32
  }
  func.func @transform_4(%arg0: i32, %arg1: i32) -> (i32, i32) {
    %c0_i32 = arith.constant 0 : i32
    %c0_i32_0 = arith.constant 0 : i32
    return %arg0, %c0_i32 : i32, i32
  }
  func.func @transform_5(%arg0: i32, %arg1: i32) -> (i32, i32) {
    %c0_i32 = arith.constant 0 : i32
    %c0_i32_0 = arith.constant 0 : i32
    return %arg0, %c0_i32 : i32, i32
  }
  func.func @transform_6(%arg0: i32, %arg1: i32) -> (i32, i32) {
    %c0_i32 = arith.constant 0 : i32
    return %arg0, %arg1 : i32, i32
  }
}

</mosaic_0001>

<llo_original>
// kernel: tpu_custom_call.1
$region0: #{tpu_custom_call.1}
  #allocation0 [shape = 'u32[]', space=smem, size = 0x4, offset = 0x4, fixed_abs, tag = 'smem constant byte address 0x4 - core index']
  #allocation1 [shape = 'u32[144,128]{1,0:T(1,128)}', space=vmem, size = 0x12000, scoped, tag = 'internal scratch']
  #allocation2 [shape = 'f32[32,64]{1,0:T(8,128)}', space=vmem, size = 0x4000, scoped, tag = 'scratch operand']
  #allocation3 [shape = 'f32[32,1]{1,0:T(8,128)}', space=vmem, size = 0x4000, scoped, tag = 'scratch operand']
  %s0 = inlined_call_operand.vmem [shape: f32[64,64], index: 0, kind: input, shape index: {}]
  %s1 = inlined_call_operand.vmem [shape: f32[3,128,64], index: 1, kind: input, shape index: {}]
  %s2 = inlined_call_operand.vmem [shape: f32[3,1,128], index: 2, kind: input, shape index: {}]
  %s3 = inlined_call_operand.hbm [shape: f32[64,64], index: 3, kind: output, shape index: {0}]
  %s4 = inlined_call_operand.vmem [shape: f32[64,1], index: 4, kind: output, shape index: {1}]
  %s5 = inlined_call_operand.vmem [shape: s32[64,3], index: 5, kind: output, shape index: {2}]
  %s6 = inlined_call_operand.hbm [shape: f32[64,384], index: 6, kind: output, shape index: {3}]
  %7 = xla_tuple %s3, %s4, %s5, %s6
  %s8 = sld [smem:[#allocation0]]
  $region77: #{tpu_custom_call.1} parent=0
    _
  %s10 = ssub.s32 1, %s8
  %s11 = scalar_select 0, %s10, %s8
  $region1: #{tpu_custom_call.1} parent=0
    #allocation4 [shape = 'u8[32768]{0}', space=vmem, size = 0x8000, scoped, tag = 'output window, operand 0']
    #allocation5 [shape = 's32[2]{0}', space=sflag, size = 0x8, scoped, tag = 'scoped memory for tpu_custom_call.1']
    #allocation6 [shape = 'u8[32768]{0}', space=vmem, size = 0x8000, scoped, tag = 'output window, operand 3']
    #allocation7 [shape = 's32[2]{0}', space=sflag, size = 0x8, scoped, tag = 'scoped memory for tpu_custom_call.1']
    %12 = vsyncpa [#allocation5], 0
    %s13 = scalar_lea.sflag [#allocation5], 1
    %14 = vsyncpa %s13, 0
    %15 = vsyncpa [#allocation7], 0
    %s16 = scalar_lea.sflag [#allocation7], 1
    %17 = vsyncpa %s16, 0
    loop: start=0, step=1, limit=8
    $region2: #{tpu_custom_call.1} parent=1 // loop_pre_header
      _
    $region3: #{tpu_custom_call.1} parent=1 // loop_header
      %s19 = sphi 0, %s23
      %p20 = scmp.ge.s32.totalorder %s19, 8
      %s26 = sphi 0, %s38
      %s27 = sphi 0, %s34
      %s28 = sphi 0, %s26
      %s29 = sphi 0, %s27
      %s30 = sphi 0, %s28
      %s31 = sphi 0, %s29
      %s41 = sphi 0, %s43
      %s44 = sphi 0, %s41
      %s45 = sphi 0, %s44
      %s61 = sphi 0, %s45
      %s65 = sphi 0, %s65
      %s67 = sphi 0, %s65
      %s68 = sphi 0, %s67
      %s82 = sphi 0, %s68
      %s86 = sphi 0, %s86
      %s88 = sphi 0, %s86
      %s89 = sphi 0, %s88
      %s103 = sphi 0, %s89
      %s109 = sphi 0, %s111
      %s112 = sphi 0, %s109
      %s113 = sphi 0, %s112
      %s129 = sphi 0, %s113
      %s135 = sphi 0, %s137
      %s138 = sphi 0, %s135
      %s139 = sphi 0, %s138
      %s155 = sphi 0, %s139
      %s161 = sphi 0, %s163
      %s164 = sphi 0, %s161
      %s165 = sphi 0, %s164
      %s181 = sphi 0, %s165
      %s189 = sphi 0, %s191
      %s192 = sphi 0, %s189
      %s193 = sphi 0, %s192
      %s209 = sphi 0, %s193
    $region4: #{tpu_custom_call.1} parent=1 // loop_header_branch
      %22 = sbr.rel (%p20) target = $region8
    $region5: #{tpu_custom_call.1} parent=1 // loop_body
      %s24 = ssub.s32 %s19, 1
      %s25 = ssub.s32 %s19, 2
      %s32 = sadd.s32 1, %s27
      %p33 = scmp.ge.s32.totalorder %s32, 3
      %s34 = scalar_select %p33, 0, %s32
      %s35 = sadd.s32 1, %s26
      %s36 = scalar_select %p33, %s35, %s26
      %p37 = scmp.ge.s32.totalorder %s36, 2
      %s38 = scalar_select %p37, 0, %s36
      %s39 = ssub.s32 %s26, %s38
      %p40 = scmp.eq.s32.totalorder %s39, 0
      %s42 = sadd.s32 %s41, 1
      %s43 = scalar_select %p40, %s41, %s42
      %p46 = pneg %p40
      %p47 = scmp.eq.s32.totalorder %s19, 5
      %p48 = por %p46, %p47
      %p49 = scmp.ne.s32.totalorder %s41, %s44
      %p50 = scmp.eq.s32.totalorder %s19, 0
      %p51 = por %p49, %p50
      %p52 = scmp.ne.s32.totalorder %s41, %s44
      %p53 = scmp.eq.s32.totalorder %s24, 5
      %p54 = por %p52, %p53
      %p55 = scmp.ne.s32.totalorder %s44, %s45
      %p56 = scmp.eq.s32.totalorder %s24, 0
      %p57 = por %p55, %p56
      %p58 = scmp.ne.s32.totalorder %s44, %s45
      %p59 = scmp.eq.s32.totalorder %s25, 5
      %p60 = por %p58, %p59
      %p62 = scmp.ne.s32.totalorder %s45, %s61
      %p63 = scmp.eq.s32.totalorder %s25, 0
      %p64 = por %p62, %p63
      %s66 = sadd.s32 %s65, 1
      %p69 = scmp.eq.s32.totalorder %s19, 5
      %p70 = scmp.ne.s32.totalorder %s65, %s67
      %p71 = scmp.eq.s32.totalorder %s19, 0
      %p72 = por %p70, %p71
      %p73 = scmp.ne.s32.totalorder %s65, %s67
      %p74 = scmp.eq.s32.totalorder %s24, 5
      %p75 = por %p73, %p74
      %p76 = scmp.ne.s32.totalorder %s67, %s68
      %p77 = scmp.eq.s32.totalorder %s24, 0
      %p78 = por %p76, %p77
      %p79 = scmp.ne.s32.totalorder %s67, %s68
      %p80 = scmp.eq.s32.totalorder %s25, 5
      %p81 = por %p79, %p80
      %p83 = scmp.ne.s32.totalorder %s68, %s82
      %p84 = scmp.eq.s32.totalorder %s25, 0
      %p85 = por %p83, %p84
      %s87 = sadd.s32 %s86, 1
      %p90 = scmp.eq.s32.totalorder %s19, 5
      %p91 = scmp.ne.s32.totalorder %s86, %s88
      %p92 = scmp.eq.s32.totalorder %s19, 0
      %p93 = por %p91, %p92
      %p94 = scmp.ne.s32.totalorder %s86, %s88
      %p95 = scmp.eq.s32.totalorder %s24, 5
      %p96 = por %p94, %p95
      %p97 = scmp.ne.s32.totalorder %s88, %s89
      %p98 = scmp.eq.s32.totalorder %s24, 0
      %p99 = por %p97, %p98
      %p100 = scmp.ne.s32.totalorder %s88, %s89
      %p101 = scmp.eq.s32.totalorder %s25, 5
      %p102 = por %p100, %p101
      %p104 = scmp.ne.s32.totalorder %s89, %s103
      %p105 = scmp.eq.s32.totalorder %s25, 0
      %p106 = por %p104, %p105
      %s107 = ssub.s32 %s26, %s38
      %p108 = scmp.eq.s32.totalorder %s107, 0
      %s110 = sadd.s32 %s109, 1
      %s111 = scalar_select %p108, %s109, %s110
      %p114 = pneg %p108
      %p115 = scmp.eq.s32.totalorder %s19, 5
      %p116 = por %p114, %p115
      %p117 = scmp.ne.s32.totalorder %s109, %s112
      %p118 = scmp.eq.s32.totalorder %s19, 0
      %p119 = por %p117, %p118
      %p120 = scmp.ne.s32.totalorder %s109, %s112
      %p121 = scmp.eq.s32.totalorder %s24, 5
      %p122 = por %p120, %p121
      %p123 = scmp.ne.s32.totalorder %s112, %s113
      %p124 = scmp.eq.s32.totalorder %s24, 0
      %p125 = por %p123, %p124
      %p126 = scmp.ne.s32.totalorder %s112, %s113
      %p127 = scmp.eq.s32.totalorder %s25, 5
      %p128 = por %p126, %p127
      %p130 = scmp.ne.s32.totalorder %s113, %s129
      %p131 = scmp.eq.s32.totalorder %s25, 0
      %p132 = por %p130, %p131
      %s133 = ssub.s32 %s26, %s38
      %p134 = scmp.eq.s32.totalorder %s133, 0
      %s136 = sadd.s32 %s135, 1
      %s137 = scalar_select %p134, %s135, %s136
      %p140 = pneg %p134
      %p141 = scmp.eq.s32.totalorder %s19, 5
      %p142 = por %p140, %p141
      %p143 = scmp.ne.s32.totalorder %s135, %s138
      %p144 = scmp.eq.s32.totalorder %s19, 0
      %p145 = por %p143, %p144
      %p146 = scmp.ne.s32.totalorder %s135, %s138
      %p147 = scmp.eq.s32.totalorder %s24, 5
      %p148 = por %p146, %p147
      %p149 = scmp.ne.s32.totalorder %s138, %s139
      %p150 = scmp.eq.s32.totalorder %s24, 0
      %p151 = por %p149, %p150
      %p152 = scmp.ne.s32.totalorder %s138, %s139
      %p153 = scmp.eq.s32.totalorder %s25, 5
      %p154 = por %p152, %p153
      %p156 = scmp.ne.s32.totalorder %s139, %s155
      %p157 = scmp.eq.s32.totalorder %s25, 0
      %p158 = por %p156, %p157
      %s159 = ssub.s32 %s26, %s38
      %p160 = scmp.eq.s32.totalorder %s159, 0
      %s162 = sadd.s32 %s161, 1
      %s163 = scalar_select %p160, %s161, %s162
      %p166 = pneg %p160
      %p167 = scmp.eq.s32.totalorder %s19, 5
      %p168 = por %p166, %p167
      %p169 = scmp.ne.s32.totalorder %s161, %s164
      %p170 = scmp.eq.s32.totalorder %s19, 0
      %p171 = por %p169, %p170
      %p172 = scmp.ne.s32.totalorder %s161, %s164
      %p173 = scmp.eq.s32.totalorder %s24, 5
      %p174 = por %p172, %p173
      %p175 = scmp.ne.s32.totalorder %s164, %s165
      %p176 = scmp.eq.s32.totalorder %s24, 0
      %p177 = por %p175, %p176
      %p178 = scmp.ne.s32.totalorder %s164, %s165
      %p179 = scmp.eq.s32.totalorder %s25, 5
      %p180 = por %p178, %p179
      %p182 = scmp.ne.s32.totalorder %s165, %s181
      %p183 = scmp.eq.s32.totalorder %s25, 0
      %p184 = por %p182, %p183
      %s185 = ssub.s32 %s26, %s38
      %s186 = ssub.s32 %s27, %s34
      %s187 = sor.u32 %s185, %s186
      %p188 = scmp.eq.s32.totalorder %s187, 0
      %s190 = sadd.s32 %s189, 1
      %s191 = scalar_select %p188, %s189, %s190
      %p194 = pneg %p188
      %p195 = scmp.eq.s32.totalorder %s19, 5
      %p196 = por %p194, %p195
      %p197 = scmp.ne.s32.totalorder %s189, %s192
      %p198 = scmp.eq.s32.totalorder %s19, 0
      %p199 = por %p197, %p198
      %p200 = scmp.ne.s32.totalorder %s189, %s192
      %p201 = scmp.eq.s32.totalorder %s24, 5
      %p202 = por %p200, %p201
      %p203 = scmp.ne.s32.totalorder %s192, %s193
      %p204 = scmp.eq.s32.totalorder %s24, 0
      %p205 = por %p203, %p204
      %p206 = scmp.ne.s32.totalorder %s192, %s193
      %p207 = scmp.eq.s32.totalorder %s25, 5
      %p208 = por %p206, %p207
      %p210 = scmp.ne.s32.totalorder %s193, %s209
      %p211 = scmp.eq.s32.totalorder %s25, 0
      %p212 = por %p210, %p211
      %p213 = scmp.le.s32.totalorder 1, %s19
      %p214 = scmp.lt.s32.totalorder %s19, 7
      %p215 = pnand %p213, %p214
      %p216 = pneg %p215
      // Predicated region
      $region9: #{tpu_custom_call.1} parent=5 // pred_check
        _
      $region10: #{tpu_custom_call.1} parent=5 // pred_check_branch
        %218 = sbr.rel (%p215) target = $region12
      $region11: #{tpu_custom_call.1} parent=5 // pred_region
        %s219 = ssub.s32 %s19, 1
        // Predicated region
        $region13: #{tpu_custom_call.1} parent=11 // pred_check
          %p220 = pneg %p78
        $region14: #{tpu_custom_call.1} parent=11 // pred_check_branch
          %222 = sbr.rel (%p220) target = $region16
        $region15: #{tpu_custom_call.1} parent=11 // pred_region
          _
        $region16: #{tpu_custom_call.1} parent=11 // pred_fallthru
          _
        // Predicated region
        $region17: #{tpu_custom_call.1} parent=11 // pred_check
          %p223 = pneg %p99
        $region18: #{tpu_custom_call.1} parent=11 // pred_check_branch
          %225 = sbr.rel (%p223) target = $region20
        $region19: #{tpu_custom_call.1} parent=11 // pred_region
          _
        $region20: #{tpu_custom_call.1} parent=11 // pred_fallthru
          _
      $region12: #{tpu_custom_call.1} parent=5 // pred_fallthru
        _
      %p226 = scmp.lt.s32.totalorder %s19, 6
      // Predicated region
      $region21: #{tpu_custom_call.1} parent=5 // pred_check
        %p227 = pneg %p226
      $region22: #{tpu_custom_call.1} parent=5 // pred_check_branch
        %229 = sbr.rel (%p227) target = $region24
      $region23: #{tpu_custom_call.1} parent=5 // pred_region
        // Predicated region
        $region25: #{tpu_custom_call.1} parent=23 // pred_check
          %p230 = pneg %p51
        $region26: #{tpu_custom_call.1} parent=23 // pred_check_branch
          %232 = sbr.rel (%p230) target = $region28
        $region27: #{tpu_custom_call.1} parent=23 // pred_region
          %s233 = smul.u32 4, %s26
          %p234 = scmp.lt.s32.totalorder %s233, 7
          %s235 = scalar_select %p234, %s233, 7
          %s236 = smul.addr %s235, 8
          %s237 = scalar_lea.vmem %s0, %s236
          %s238 = smul.u32 4, %s26
        $region28: #{tpu_custom_call.1} parent=23 // pred_fallthru
          _
      $region24: #{tpu_custom_call.1} parent=5 // pred_fallthru
        _
      %p239 = scmp.le.s32.totalorder 1, %s19
      %p240 = scmp.lt.s32.totalorder %s19, 7
      %p241 = pnand %p239, %p240
      %p242 = pneg %p241
      // Predicated region
      $region29: #{tpu_custom_call.1} parent=5 // pred_check
        _
      $region30: #{tpu_custom_call.1} parent=5 // pred_check_branch
        %244 = sbr.rel (%p241) target = $region32
      $region31: #{tpu_custom_call.1} parent=5 // pred_region
        %s245 = ssub.s32 %s19, 1
        %s246 = smul.u32 4, %s28
        %p247 = scmp.lt.s32.totalorder %s246, 7
        %s248 = scalar_select %p247, %s246, 7
        %s249 = smul.addr %s248, 8
        %s250 = scalar_lea.vmem %s0, %s249
        %p251 = pneg %p57
        %p252 = pneg %p54
        %p253 = pneg %p78
        %p254 = pneg %p75
        %p255 = pneg %p99
        %p256 = pneg %p96
        %p257 = pneg %p125
        %p258 = pneg %p122
        %s259 = sand.u32 %s112, 1
        %s260 = scalar_lea.sflag [#allocation5], %s259
        %s261 = sand.u32 %s112, 1
        %s262 = smul.addr %s261, 32
        %s263 = scalar_lea.vmem [#allocation4], %s262
        %p264 = pneg %p151
        %p265 = pneg %p148
        %s266 = smul.u32 4, %s28
        %p267 = scmp.lt.s32.totalorder %s266, 7
        %s268 = scalar_select %p267, %s266, 7
        %s269 = smul.addr %s268, 8
        %s270 = scalar_lea.vmem %s4, %s269
        %p271 = pneg %p177
        %p272 = pneg %p174
        %s273 = smul.u32 4, %s28
        %p274 = scmp.lt.s32.totalorder %s273, 7
        %s275 = scalar_select %p274, %s273, 7
        %s276 = smul.addr %s275, 8
        %s277 = scalar_lea.vmem %s5, %s276
        %p278 = pneg %p205
        %p279 = pneg %p202
        %s280 = sand.u32 %s192, 1
        %s281 = scalar_lea.sflag [#allocation7], %s280
        %s282 = sand.u32 %s192, 1
        %s283 = smul.addr %s282, 32
        %s284 = scalar_lea.vmem [#allocation6], %s283
        %s285 = smul.u32 4, %s28
        %p286 = scmp.lt.s32.totalorder %s285, 7
        %s287 = scalar_select %p286, %s285, 7
        %s288 = smul.addr %s287, 8
        %s289 = scalar_lea.vmem %s0, %s288
        %s290 = smul.u32 4, %s28
        %s291 = smul.u32 4, %s28
        %s292 = smul.u32 4, %s28
        %p293 = scmp.lt.s32.totalorder %s292, 7
        %s294 = scalar_select %p293, %s292, 7
        %s295 = smul.addr %s294, 8
        %s296 = scalar_lea.vmem %s4, %s295
        %s297 = smul.u32 4, %s28
        %s298 = smul.u32 4, %s28
        %p299 = scmp.lt.s32.totalorder %s298, 7
        %s300 = scalar_select %p299, %s298, 7
        %s301 = smul.addr %s300, 8
        %s302 = scalar_lea.vmem %s5, %s301
        %s303 = smul.u32 4, %s28
        %s304 = smul.u32 4, %s28
        %p305 = scmp.eq.s32.totalorder %s29, 0
        // Predicated region
        $region33: #{tpu_custom_call.1} parent=31 // pred_check
          %p306 = pneg %p305
        $region34: #{tpu_custom_call.1} parent=31 // pred_check_branch
          %308 = sbr.rel (%p306) target = $region36
        $region35: #{tpu_custom_call.1} parent=31 // pred_region
          %v309 = vld [vmem:[%s289] sm:$0xff]
          %v310 = vld [vmem:[%s289 + $0x8] sm:$0xff]
          %v311 = vld [vmem:[%s289 + $0x10] sm:$0xff]
          %v312 = vld [vmem:[%s289 + $0x18] sm:$0xff]
          %vm313 = vcmask 523264
          %314 = vst.msk [vmem:[#allocation2] sm:$0xff] %vm313, %v309
          %315 = vst.msk [vmem:[#allocation2 + $0x8] sm:$0xff] %vm313, %v310
          %316 = vst.msk [vmem:[#allocation2 + $0x10] sm:$0xff] %vm313, %v311
          %317 = vst.msk [vmem:[#allocation2 + $0x18] sm:$0xff] %vm313, %v312
          %v318 = vmul.f32 %v309, %v309
          %v319 = vmul.f32 %v310, %v310
          %v320 = vmul.f32 %v311, %v311
          %v321 = vmul.f32 %v312, %v312
          %v322 = vsel %vm313, %v318, 0.0
          %323 = vadd.xlane.f32.xlu0 %v322
          %v324 = vpop.xlane.xlu0 %323
          %v325 = vsel %vm313, %v319, 0.0
          %326 = vadd.xlane.f32.xlu0 %v325
          %v327 = vpop.xlane.xlu0 %326
          %v328 = vsel %vm313, %v320, 0.0
          %329 = vadd.xlane.f32.xlu0 %v328
          %v330 = vpop.xlane.xlu0 %329
          %v331 = vsel %vm313, %v321, 0.0
          %332 = vadd.xlane.f32.xlu0 %v331
          %v333 = vpop.xlane.xlu0 %332
          %vm334 = vcmask 7168
          %335 = vst.msk [vmem:[#allocation3] sm:$0xff] %vm334, %v324
          %336 = vst.msk [vmem:[#allocation3 + $0x8] sm:$0xff] %vm334, %v327
          %337 = vst.msk [vmem:[#allocation3 + $0x10] sm:$0xff] %vm334, %v330
          %338 = vst.msk [vmem:[#allocation3 + $0x18] sm:$0xff] %vm334, %v333
          %339 = vst.msk [vmem:[%s296] sm:$0xff] %vm334, 0.0
          %340 = vst.msk [vmem:[%s296 + $0x8] sm:$0xff] %vm334, 0.0
          %341 = vst.msk [vmem:[%s296 + $0x10] sm:$0xff] %vm334, 0.0
          %342 = vst.msk [vmem:[%s296 + $0x18] sm:$0xff] %vm334, 0.0
        $region36: #{tpu_custom_call.1} parent=31 // pred_fallthru
          _
        %v343 = vld [vmem:[#allocation2] sm:$0xff]
        %v344 = vld [vmem:[#allocation2 + $0x8] sm:$0xff]
        %v345 = vld [vmem:[#allocation2 + $0x10] sm:$0xff]
        %v346 = vld [vmem:[#allocation2 + $0x18] sm:$0xff]
        %v347 = vld [vmem:[#allocation3] sm:$0xff]
        %v348 = vld [vmem:[#allocation3 + $0x8] sm:$0xff]
        %v349 = vld [vmem:[#allocation3 + $0x10] sm:$0xff]
        %v350 = vld [vmem:[#allocation3 + $0x18] sm:$0xff]
        %s351 = smul.u32 %s29, 128
        %s352 = scalar_lea.vmem %s1, %s351
        %v353 = vld [vmem:[%s352] sm:$0xff]
        %v354 = vld [vmem:[%s352 + $0x8] sm:$0xff]
        %v355 = vld [vmem:[%s352 + $0x10] sm:$0xff]
        %v356 = vld [vmem:[%s352 + $0x18] sm:$0xff]
        %v357 = vld [vmem:[%s352 + $0x20] sm:$0xff]
        %v358 = vld [vmem:[%s352 + $0x28] sm:$0xff]
        %v359 = vld [vmem:[%s352 + $0x30] sm:$0xff]
        %v360 = vld [vmem:[%s352 + $0x38] sm:$0xff]
        %v361 = vld [vmem:[%s352 + $0x40] sm:$0xff]
        %v362 = vld [vmem:[%s352 + $0x48] sm:$0xff]
        %v363 = vld [vmem:[%s352 + $0x50] sm:$0xff]
        %v364 = vld [vmem:[%s352 + $0x58] sm:$0xff]
        %v365 = vld [vmem:[%s352 + $0x60] sm:$0xff]
        %v366 = vld [vmem:[%s352 + $0x68] sm:$0xff]
        %v367 = vld [vmem:[%s352 + $0x70] sm:$0xff]
        %v368 = vld [vmem:[%s352 + $0x78] sm:$0xff]
        %s369 = scalar_lea.vmem %s2, %s29
        %v370 = vld [vmem:[%s369] sm:$0x1]
        %vm371 = vcmask 523264
        %v373 = vsel %vm371, %v343, 0
        %v376 = vsel %vm371, %v344, 0
        %v379 = vsel %vm371, %v345, 0
        %v382 = vsel %vm371, %v346, 0
        %v385 = vsel %vm371, %v353, 0
        %v388 = vsel %vm371, %v354, 0
        %v391 = vsel %vm371, %v355, 0
        %v394 = vsel %vm371, %v356, 0
        %v397 = vsel %vm371, %v357, 0
        %v400 = vsel %vm371, %v358, 0
        %v403 = vsel %vm371, %v359, 0
        %v406 = vsel %vm371, %v360, 0
        %v409 = vsel %vm371, %v361, 0
        %v412 = vsel %vm371, %v362, 0
        %v415 = vsel %vm371, %v363, 0
        %v418 = vsel %vm371, %v364, 0
        %v421 = vsel %vm371, %v365, 0
        %v424 = vsel %vm371, %v366, 0
        %v427 = vsel %vm371, %v367, 0
        %v430 = vsel %vm371, %v368, 0
        %432 = vmatprep.subr.mxu0 0.0
        %v433 = vand.u32 %v385, 4294901760
        %434 = vmatpush1.xpose.msra.mxu0 %v433
        %435 = vmatprep.subr.mxu0 0.0
        %v436 = vand.u32 %v388, 4294901760
        %437 = vmatpush1.xpose.msra.mxu0 %v436
        %438 = vmatprep.subr.mxu0 0.0
        %v439 = vand.u32 %v391, 4294901760
        %440 = vmatpush1.xpose.msra.mxu0 %v439
        %441 = vmatprep.subr.mxu0 0.0
        %v442 = vand.u32 %v394, 4294901760
        %443 = vmatpush1.xpose.msra.mxu0 %v442
        %444 = vmatprep.subr.mxu0 0.0
        %v445 = vand.u32 %v397, 4294901760
        %446 = vmatpush1.xpose.msra.mxu0 %v445
        %447 = vmatprep.subr.mxu0 0.0
        %v448 = vand.u32 %v400, 4294901760
        %449 = vmatpush1.xpose.msra.mxu0 %v448
        %450 = vmatprep.subr.mxu0 0.0
        %v451 = vand.u32 %v403, 4294901760
        %452 = vmatpush1.xpose.msra.mxu0 %v451
        %453 = vmatprep.subr.mxu0 0.0
        %v454 = vand.u32 %v406, 4294901760
        %455 = vmatpush1.xpose.msra.mxu0 %v454
        %456 = vmatprep.subr.mxu0 0.0
        %v457 = vand.u32 %v409, 4294901760
        %458 = vmatpush1.xpose.msra.mxu0 %v457
        %459 = vmatprep.subr.mxu0 0.0
        %v460 = vand.u32 %v412, 4294901760
        %461 = vmatpush1.xpose.msra.mxu0 %v460
        %462 = vmatprep.subr.mxu0 0.0
        %v463 = vand.u32 %v415, 4294901760
        %464 = vmatpush1.xpose.msra.mxu0 %v463
        %465 = vmatprep.subr.mxu0 0.0
        %v466 = vand.u32 %v418, 4294901760
        %467 = vmatpush1.xpose.msra.mxu0 %v466
        %468 = vmatprep.subr.mxu0 0.0
        %v469 = vand.u32 %v421, 4294901760
        %470 = vmatpush1.xpose.msra.mxu0 %v469
        %471 = vmatprep.subr.mxu0 0.0
        %v472 = vand.u32 %v424, 4294901760
        %473 = vmatpush1.xpose.msra.mxu0 %v472
        %474 = vmatprep.subr.mxu0 0.0
        %v475 = vand.u32 %v427, 4294901760
        %476 = vmatpush1.xpose.msra.mxu0 %v475
        %477 = vmatprep.subr.mxu0 0.0
        %v478 = vand.u32 %v430, 4294901760
        %479 = vmatpush1.xpose.msra.mxu0 %v478
        %480 = vmatprep.subr.mxu0 0.0
        %481 = vmatpush1.xpose.msra.mxu0 0.0
        %482 = vmatprep.subr.mxu0 0.0
        %483 = vmatpush1.xpose.msra.mxu0 0.0
        %484 = vmatprep.subr.mxu0 0.0
        %485 = vmatpush1.xpose.msra.mxu0 0.0
        %486 = vmatprep.subr.mxu0 0.0
        %487 = vmatpush1.xpose.msra.mxu0 0.0
        %488 = vmatprep.subr.mxu0 0.0
        %489 = vmatpush1.xpose.msra.mxu0 0.0
        %490 = vmatprep.subr.mxu0 0.0
        %491 = vmatpush1.xpose.msra.mxu0 0.0
        %492 = vmatprep.subr.mxu0 0.0
        %493 = vmatpush1.xpose.msra.mxu0 0.0
        %494 = vmatprep.subr.mxu0 0.0
        %495 = vmatpush1.xpose.msra.mxu0 0.0
        %496 = vmatprep.subr.mxu0 0.0
        %497 = vmatpush1.xpose.msra.mxu0 0.0
        %498 = vmatprep.subr.mxu0 0.0
        %499 = vmatpush1.xpose.msra.mxu0 0.0
        %500 = vmatprep.subr.mxu0 0.0
        %501 = vmatpush1.xpose.msra.mxu0 0.0
        %502 = vmatprep.subr.mxu0 0.0
        %503 = vmatpush1.xpose.msra.mxu0 0.0
        %504 = vmatprep.subr.mxu0 0.0
        %505 = vmatpush1.xpose.msra.mxu0 0.0
        %506 = vmatprep.subr.mxu0 0.0
        %507 = vmatpush1.xpose.msra.mxu0 0.0
        %508 = vmatprep.subr.mxu0 0.0
        %509 = vmatpush1.xpose.msra.mxu0 0.0
        %510 = vmatprep.subr.mxu0 0.0
        %511 = vmatpush1.xpose.msra.mxu0 0.0
        %512 = vmatprep.mubr.f32.mxu0 0.0
        %v513 = vand.u32 %v373, 4294901760
        %v514 = vsub.f32 %v373, %v513
        %v515 = vand.u32 %v514, 4294901760
        %v516 = vsub.f32 %v514, %v515
        %v517 = vand.u32 %v516, 4294901760
        %518 = vmatmul.mubr.f32.gmra.mrb[0].mxu0 %v517
        %v519 = vpop.f32.mrb[0].mxu0
        %v520 = vadd.f32 0.0, %v519
        %v521 = vpop.f32.mrb[0].mxu0
        %522 = vmatprep.mubr.f32.mxu0 0.0
        %v523 = vand.u32 %v376, 4294901760
        %v524 = vsub.f32 %v376, %v523
        %v525 = vand.u32 %v524, 4294901760
        %v526 = vsub.f32 %v524, %v525
        %v527 = vand.u32 %v526, 4294901760
        %528 = vmatmul.mubr.f32.gmra.mrb[0].mxu0 %v527
        %v529 = vpop.f32.mrb[0].mxu0
        %v530 = vadd.f32 0.0, %v529
        %v531 = vpop.f32.mrb[0].mxu0
        %532 = vmatprep.mubr.f32.mxu0 0.0
        %v533 = vand.u32 %v379, 4294901760
        %v534 = vsub.f32 %v379, %v533
        %v535 = vand.u32 %v534, 4294901760
        %v536 = vsub.f32 %v534, %v535
        %v537 = vand.u32 %v536, 4294901760
        %538 = vmatmul.mubr.f32.gmra.mrb[0].mxu0 %v537
        %v539 = vpop.f32.mrb[0].mxu0
        %v540 = vadd.f32 0.0, %v539
        %v541 = vpop.f32.mrb[0].mxu0
        %542 = vmatprep.mubr.f32.mxu0 0.0
        %v543 = vand.u32 %v382, 4294901760
        %v544 = vsub.f32 %v382, %v543
        %v545 = vand.u32 %v544, 4294901760
        %v546 = vsub.f32 %v544, %v545
        %v547 = vand.u32 %v546, 4294901760
        %548 = vmatmul.mubr.f32.gmra.mrb[0].mxu0 %v547
        %v549 = vpop.f32.mrb[0].mxu0
        %v550 = vadd.f32 0.0, %v549
        %v551 = vpop.f32.mrb[0].mxu0
        %552 = vdwg.mxu0
        %553 = vmatprep.subr.mxu0 0.0
        %v554 = vand.u32 %v385, 4294901760
        %v555 = vsub.f32 %v385, %v554
        %v556 = vand.u32 %v555, 4294901760
        %v557 = vsub.f32 %v555, %v556
        %v558 = vand.u32 %v557, 4294901760
        %559 = vmatpush1.xpose.msra.mxu0 %v558
        %560 = vmatprep.subr.mxu0 0.0
        %v561 = vand.u32 %v388, 4294901760
        %v562 = vsub.f32 %v388, %v561
        %v563 = vand.u32 %v562, 4294901760
        %v564 = vsub.f32 %v562, %v563
        %v565 = vand.u32 %v564, 4294901760
        %566 = vmatpush1.xpose.msra.mxu0 %v565
        %567 = vmatprep.subr.mxu0 0.0
        %v568 = vand.u32 %v391, 4294901760
        %v569 = vsub.f32 %v391, %v568
        %v570 = vand.u32 %v569, 4294901760
        %v571 = vsub.f32 %v569, %v570
        %v572 = vand.u32 %v571, 4294901760
        %573 = vmatpush1.xpose.msra.mxu0 %v572
        %574 = vmatprep.subr.mxu0 0.0
        %v575 = vand.u32 %v394, 4294901760
        %v576 = vsub.f32 %v394, %v575
        %v577 = vand.u32 %v576, 4294901760
        %v578 = vsub.f32 %v576, %v577
        %v579 = vand.u32 %v578, 4294901760
        %580 = vmatpush1.xpose.msra.mxu0 %v579
        %581 = vmatprep.subr.mxu0 0.0
        %v582 = vand.u32 %v397, 4294901760
        %v583 = vsub.f32 %v397, %v582
        %v584 = vand.u32 %v583, 4294901760
        %v585 = vsub.f32 %v583, %v584
        %v586 = vand.u32 %v585, 4294901760
        %587 = vmatpush1.xpose.msra.mxu0 %v586
        %588 = vmatprep.subr.mxu0 0.0
        %v589 = vand.u32 %v400, 4294901760
        %v590 = vsub.f32 %v400, %v589
        %v591 = vand.u32 %v590, 4294901760
        %v592 = vsub.f32 %v590, %v591
        %v593 = vand.u32 %v592, 4294901760
        %594 = vmatpush1.xpose.msra.mxu0 %v593
        %595 = vmatprep.subr.mxu0 0.0
        %v596 = vand.u32 %v403, 4294901760
        %v597 = vsub.f32 %v403, %v596
        %v598 = vand.u32 %v597, 4294901760
        %v599 = vsub.f32 %v597, %v598
        %v600 = vand.u32 %v599, 4294901760
        %601 = vmatpush1.xpose.msra.mxu0 %v600
        %602 = vmatprep.subr.mxu0 0.0
        %v603 = vand.u32 %v406, 4294901760
        %v604 = vsub.f32 %v406, %v603
        %v605 = vand.u32 %v604, 4294901760
        %v606 = vsub.f32 %v604, %v605
        %v607 = vand.u32 %v606, 4294901760
        %608 = vmatpush1.xpose.msra.mxu0 %v607
        %609 = vmatprep.subr.mxu0 0.0
        %v610 = vand.u32 %v409, 4294901760
        %v611 = vsub.f32 %v409, %v610
        %v612 = vand.u32 %v611, 4294901760
        %v613 = vsub.f32 %v611, %v612
        %v614 = vand.u32 %v613, 4294901760
        %615 = vmatpush1.xpose.msra.mxu0 %v614
        %616 = vmatprep.subr.mxu0 0.0
        %v617 = vand.u32 %v412, 4294901760
        %v618 = vsub.f32 %v412, %v617
        %v619 = vand.u32 %v618, 4294901760
        %v620 = vsub.f32 %v618, %v619
        %v621 = vand.u32 %v620, 4294901760
        %622 = vmatpush1.xpose.msra.mxu0 %v621
        %623 = vmatprep.subr.mxu0 0.0
        %v624 = vand.u32 %v415, 4294901760
        %v625 = vsub.f32 %v415, %v624
        %v626 = vand.u32 %v625, 4294901760
        %v627 = vsub.f32 %v625, %v626
        %v628 = vand.u32 %v627, 4294901760
        %629 = vmatpush1.xpose.msra.mxu0 %v628
        %630 = vmatprep.subr.mxu0 0.0
        %v631 = vand.u32 %v418, 4294901760
        %v632 = vsub.f32 %v418, %v631
        %v633 = vand.u32 %v632, 4294901760
        %v634 = vsub.f32 %v632, %v633
        %v635 = vand.u32 %v634, 4294901760
        %636 = vmatpush1.xpose.msra.mxu0 %v635
        %637 = vmatprep.subr.mxu0 0.0
        %v638 = vand.u32 %v421, 4294901760
        %v639 = vsub.f32 %v421, %v638
        %v640 = vand.u32 %v639, 4294901760
        %v641 = vsub.f32 %v639, %v640
        %v642 = vand.u32 %v641, 4294901760
        %643 = vmatpush1.xpose.msra.mxu0 %v642
        %644 = vmatprep.subr.mxu0 0.0
        %v645 = vand.u32 %v424, 4294901760
        %v646 = vsub.f32 %v424, %v645
        %v647 = vand.u32 %v646, 4294901760
        %v648 = vsub.f32 %v646, %v647
        %v649 = vand.u32 %v648, 4294901760
        %650 = vmatpush1.xpose.msra.mxu0 %v649
        %651 = vmatprep.subr.mxu0 0.0
        %v652 = vand.u32 %v427, 4294901760
        %v653 = vsub.f32 %v427, %v652
        %v654 = vand.u32 %v653, 4294901760
        %v655 = vsub.f32 %v653, %v654
        %v656 = vand.u32 %v655, 4294901760
        %657 = vmatpush1.xpose.msra.mxu0 %v656
        %658 = vmatprep.subr.mxu0 0.0
        %v659 = vand.u32 %v430, 4294901760
        %v660 = vsub.f32 %v430, %v659
        %v661 = vand.u32 %v660, 4294901760
        %v662 = vsub.f32 %v660, %v661
        %v663 = vand.u32 %v662, 4294901760
        %664 = vmatpush1.xpose.msra.mxu0 %v663
        %665 = vmatprep.subr.mxu0 0.0
        %666 = vmatpush1.xpose.msra.mxu0 0.0
        %667 = vmatprep.subr.mxu0 0.0
        %668 = vmatpush1.xpose.msra.mxu0 0.0
        %669 = vmatprep.subr.mxu0 0.0
        %670 = vmatpush1.xpose.msra.mxu0 0.0
        %671 = vmatprep.subr.mxu0 0.0
        %672 = vmatpush1.xpose.msra.mxu0 0.0
        %673 = vmatprep.subr.mxu0 0.0
        %674 = vmatpush1.xpose.msra.mxu0 0.0
        %675 = vmatprep.subr.mxu0 0.0
        %676 = vmatpush1.xpose.msra.mxu0 0.0
        %677 = vmatprep.subr.mxu0 0.0
        %678 = vmatpush1.xpose.msra.mxu0 0.0
        %679 = vmatprep.subr.mxu0 0.0
        %680 = vmatpush1.xpose.msra.mxu0 0.0
        %681 = vmatprep.subr.mxu0 0.0
        %682 = vmatpush1.xpose.msra.mxu0 0.0
        %683 = vmatprep.subr.mxu0 0.0
        %684 = vmatpush1.xpose.msra.mxu0 0.0
        %685 = vmatprep.subr.mxu0 0.0
        %686 = vmatpush1.xpose.msra.mxu0 0.0
        %687 = vmatprep.subr.mxu0 0.0
        %688 = vmatpush1.xpose.msra.mxu0 0.0
        %689 = vmatprep.subr.mxu0 0.0
        %690 = vmatpush1.xpose.msra.mxu0 0.0
        %691 = vmatprep.subr.mxu0 0.0
        %692 = vmatpush1.xpose.msra.mxu0 0.0
        %693 = vmatprep.subr.mxu0 0.0
        %694 = vmatpush1.xpose.msra.mxu0 0.0
        %695 = vmatprep.subr.mxu0 0.0
        %696 = vmatpush1.xpose.msra.mxu0 0.0
        %697 = vmatprep.mubr.f32.mxu0 0.0
        %v698 = vand.u32 %v373, 4294901760
        %699 = vmatmul.mubr.f32.gmra.mrb[0].mxu0 %v698
        %v700 = vpop.f32.mrb[0].mxu0
        %v701 = vadd.f32 %v520, %v700
        %v702 = vpop.f32.mrb[0].mxu0
        %703 = vmatprep.mubr.f32.mxu0 0.0
        %v704 = vand.u32 %v376, 4294901760
        %705 = vmatmul.mubr.f32.gmra.mrb[0].mxu0 %v704
        %v706 = vpop.f32.mrb[0].mxu0
        %v707 = vadd.f32 %v530, %v706
        %v708 = vpop.f32.mrb[0].mxu0
        %709 = vmatprep.mubr.f32.mxu0 0.0
        %v710 = vand.u32 %v379, 4294901760
        %711 = vmatmul.mubr.f32.gmra.mrb[0].mxu0 %v710
        %v712 = vpop.f32.mrb[0].mxu0
        %v713 = vadd.f32 %v540, %v712
        %v714 = vpop.f32.mrb[0].mxu0
        %715 = vmatprep.mubr.f32.mxu0 0.0
        %v716 = vand.u32 %v382, 4294901760
        %717 = vmatmul.mubr.f32.gmra.mrb[0].mxu0 %v716
        %v718 = vpop.f32.mrb[0].mxu0
        %v719 = vadd.f32 %v550, %v718
        %v720 = vpop.f32.mrb[0].mxu0
        %721 = vdwg.mxu0
        %722 = vmatprep.subr.mxu0 0.0
        %v723 = vand.u32 %v385, 4294901760
        %v724 = vsub.f32 %v385, %v723
        %725 = vmatpush1.xpose.msra.mxu0 %v724
        %726 = vmatprep.subr.mxu0 0.0
        %v727 = vand.u32 %v388, 4294901760
        %v728 = vsub.f32 %v388, %v727
        %729 = vmatpush1.xpose.msra.mxu0 %v728
        %730 = vmatprep.subr.mxu0 0.0
        %v731 = vand.u32 %v391, 4294901760
        %v732 = vsub.f32 %v391, %v731
        %733 = vmatpush1.xpose.msra.mxu0 %v732
        %734 = vmatprep.subr.mxu0 0.0
        %v735 = vand.u32 %v394, 4294901760
        %v736 = vsub.f32 %v394, %v735
        %737 = vmatpush1.xpose.msra.mxu0 %v736
        %738 = vmatprep.subr.mxu0 0.0
        %v739 = vand.u32 %v397, 4294901760
        %v740 = vsub.f32 %v397, %v739
        %741 = vmatpush1.xpose.msra.mxu0 %v740
        %742 = vmatprep.subr.mxu0 0.0
        %v743 = vand.u32 %v400, 4294901760
        %v744 = vsub.f32 %v400, %v743
        %745 = vmatpush1.xpose.msra.mxu0 %v744
        %746 = vmatprep.subr.mxu0 0.0
        %v747 = vand.u32 %v403, 4294901760
        %v748 = vsub.f32 %v403, %v747
        %749 = vmatpush1.xpose.msra.mxu0 %v748
        %750 = vmatprep.subr.mxu0 0.0
        %v751 = vand.u32 %v406, 4294901760
        %v752 = vsub.f32 %v406, %v751
        %753 = vmatpush1.xpose.msra.mxu0 %v752
        %754 = vmatprep.subr.mxu0 0.0
        %v755 = vand.u32 %v409, 4294901760
        %v756 = vsub.f32 %v409, %v755
        %757 = vmatpush1.xpose.msra.mxu0 %v756
        %758 = vmatprep.subr.mxu0 0.0
        %v759 = vand.u32 %v412, 4294901760
        %v760 = vsub.f32 %v412, %v759
        %761 = vmatpush1.xpose.msra.mxu0 %v760
        %762 = vmatprep.subr.mxu0 0.0
        %v763 = vand.u32 %v415, 4294901760
        %v764 = vsub.f32 %v415, %v763
        %765 = vmatpush1.xpose.msra.mxu0 %v764
        %766 = vmatprep.subr.mxu0 0.0
        %v767 = vand.u32 %v418, 4294901760
        %v768 = vsub.f32 %v418, %v767
        %769 = vmatpush1.xpose.msra.mxu0 %v768
        %770 = vmatprep.subr.mxu0 0.0
        %v771 = vand.u32 %v421, 4294901760
        %v772 = vsub.f32 %v421, %v771
        %773 = vmatpush1.xpose.msra.mxu0 %v772
        %774 = vmatprep.subr.mxu0 0.0
        %v775 = vand.u32 %v424, 4294901760
        %v776 = vsub.f32 %v424, %v775
        %777 = vmatpush1.xpose.msra.mxu0 %v776
        %778 = vmatprep.subr.mxu0 0.0
        %v779 = vand.u32 %v427, 4294901760
        %v780 = vsub.f32 %v427, %v779
        %781 = vmatpush1.xpose.msra.mxu0 %v780
        %782 = vmatprep.subr.mxu0 0.0
        %v783 = vand.u32 %v430, 4294901760
        %v784 = vsub.f32 %v430, %v783
        %785 = vmatpush1.xpose.msra.mxu0 %v784
        %786 = vmatprep.subr.mxu0 0.0
        %787 = vmatpush1.xpose.msra.mxu0 0.0
        %788 = vmatprep.subr.mxu0 0.0
        %789 = vmatpush1.xpose.msra.mxu0 0.0
        %790 = vmatprep.subr.mxu0 0.0
        %791 = vmatpush1.xpose.msra.mxu0 0.0
        %792 = vmatprep.subr.mxu0 0.0
        %793 = vmatpush1.xpose.msra.mxu0 0.0
        %794 = vmatprep.subr.mxu0 0.0
        %795 = vmatpush1.xpose.msra.mxu0 0.0
        %796 = vmatprep.subr.mxu0 0.0
        %797 = vmatpush1.xpose.msra.mxu0 0.0
        %798 = vmatprep.subr.mxu0 0.0
        %799 = vmatpush1.xpose.msra.mxu0 0.0
        %800 = vmatprep.subr.mxu0 0.0
        %801 = vmatpush1.xpose.msra.mxu0 0.0
        %802 = vmatprep.subr.mxu0 0.0
        %803 = vmatpush1.xpose.msra.mxu0 0.0
        %804 = vmatprep.subr.mxu0 0.0
        %805 = vmatpush1.xpose.msra.mxu0 0.0
        %806 = vmatprep.subr.mxu0 0.0
        %807 = vmatpush1.xpose.msra.mxu0 0.0
        %808 = vmatprep.subr.mxu0 0.0
        %809 = vmatpush1.xpose.msra.mxu0 0.0
        %810 = vmatprep.subr.mxu0 0.0
        %811 = vmatpush1.xpose.msra.mxu0 0.0
        %812 = vmatprep.subr.mxu0 0.0
        %813 = vmatpush1.xpose.msra.mxu0 0.0
        %814 = vmatprep.subr.mxu0 0.0
        %815 = vmatpush1.xpose.msra.mxu0 0.0
        %816 = vmatprep.subr.mxu0 0.0
        %817 = vmatpush1.xpose.msra.mxu0 0.0
        %818 = vmatprep.mubr.f32.mxu0 0.0
        %v819 = vand.u32 %v373, 4294901760
        %v820 = vsub.f32 %v373, %v819
        %821 = vmatmul.mubr.f32.gmra.mrb[0].mxu0 %v820
        %v822 = vpop.f32.mrb[0].mxu0
        %v823 = vadd.f32 %v701, %v822
        %v824 = vpop.f32.mrb[0].mxu0
        %825 = vmatprep.mubr.f32.mxu0 0.0
        %v826 = vand.u32 %v376, 4294901760
        %v827 = vsub.f32 %v376, %v826
        %828 = vmatmul.mubr.f32.gmra.mrb[0].mxu0 %v827
        %v829 = vpop.f32.mrb[0].mxu0
        %v830 = vadd.f32 %v707, %v829
        %v831 = vpop.f32.mrb[0].mxu0
        %832 = vmatprep.mubr.f32.mxu0 0.0
        %v833 = vand.u32 %v379, 4294901760
        %v834 = vsub.f32 %v379, %v833
        %835 = vmatmul.mubr.f32.gmra.mrb[0].mxu0 %v834
        %v836 = vpop.f32.mrb[0].mxu0
        %v837 = vadd.f32 %v713, %v836
        %v838 = vpop.f32.mrb[0].mxu0
        %839 = vmatprep.mubr.f32.mxu0 0.0
        %v840 = vand.u32 %v382, 4294901760
        %v841 = vsub.f32 %v382, %v840
        %842 = vmatmul.mubr.f32.gmra.mrb[0].mxu0 %v841
        %v843 = vpop.f32.mrb[0].mxu0
        %v844 = vadd.f32 %v719, %v843
        %v845 = vpop.f32.mrb[0].mxu0
        %846 = vdwg.mxu0
        %847 = vmatprep.subr.mxu0 0.0
        %v848 = vand.u32 %v385, 4294901760
        %849 = vmatpush1.xpose.msra.mxu0 %v848
        %850 = vmatprep.subr.mxu0 0.0
        %v851 = vand.u32 %v388, 4294901760
        %852 = vmatpush1.xpose.msra.mxu0 %v851
        %853 = vmatprep.subr.mxu0 0.0
        %v854 = vand.u32 %v391, 4294901760
        %855 = vmatpush1.xpose.msra.mxu0 %v854
        %856 = vmatprep.subr.mxu0 0.0
        %v857 = vand.u32 %v394, 4294901760
        %858 = vmatpush1.xpose.msra.mxu0 %v857
        %859 = vmatprep.subr.mxu0 0.0
        %v860 = vand.u32 %v397, 4294901760
        %861 = vmatpush1.xpose.msra.mxu0 %v860
        %862 = vmatprep.subr.mxu0 0.0
        %v863 = vand.u32 %v400, 4294901760
        %864 = vmatpush1.xpose.msra.mxu0 %v863
        %865 = vmatprep.subr.mxu0 0.0
        %v866 = vand.u32 %v403, 4294901760
        %867 = vmatpush1.xpose.msra.mxu0 %v866
        %868 = vmatprep.subr.mxu0 0.0
        %v869 = vand.u32 %v406, 4294901760
        %870 = vmatpush1.xpose.msra.mxu0 %v869
        %871 = vmatprep.subr.mxu0 0.0
        %v872 = vand.u32 %v409, 4294901760
        %873 = vmatpush1.xpose.msra.mxu0 %v872
        %874 = vmatprep.subr.mxu0 0.0
        %v875 = vand.u32 %v412, 4294901760
        %876 = vmatpush1.xpose.msra.mxu0 %v875
        %877 = vmatprep.subr.mxu0 0.0
        %v878 = vand.u32 %v415, 4294901760
        %879 = vmatpush1.xpose.msra.mxu0 %v878
        %880 = vmatprep.subr.mxu0 0.0
        %v881 = vand.u32 %v418, 4294901760
        %882 = vmatpush1.xpose.msra.mxu0 %v881
        %883 = vmatprep.subr.mxu0 0.0
        %v884 = vand.u32 %v421, 4294901760
        %885 = vmatpush1.xpose.msra.mxu0 %v884
        %886 = vmatprep.subr.mxu0 0.0
        %v887 = vand.u32 %v424, 4294901760
        %888 = vmatpush1.xpose.msra.mxu0 %v887
        %889 = vmatprep.subr.mxu0 0.0
        %v890 = vand.u32 %v427, 4294901760
        %891 = vmatpush1.xpose.msra.mxu0 %v890
        %892 = vmatprep.subr.mxu0 0.0
        %v893 = vand.u32 %v430, 4294901760
        %894 = vmatpush1.xpose.msra.mxu0 %v893
        %895 = vmatprep.subr.mxu0 0.0
        %896 = vmatpush1.xpose.msra.mxu0 0.0
        %897 = vmatprep.subr.mxu0 0.0
        %898 = vmatpush1.xpose.msra.mxu0 0.0
        %899 = vmatprep.subr.mxu0 0.0
        %900 = vmatpush1.xpose.msra.mxu0 0.0
        %901 = vmatprep.subr.mxu0 0.0
        %902 = vmatpush1.xpose.msra.mxu0 0.0
        %903 = vmatprep.subr.mxu0 0.0
        %904 = vmatpush1.xpose.msra.mxu0 0.0
        %905 = vmatprep.subr.mxu0 0.0
        %906 = vmatpush1.xpose.msra.mxu0 0.0
        %907 = vmatprep.subr.mxu0 0.0
        %908 = vmatpush1.xpose.msra.mxu0 0.0
        %909 = vmatprep.subr.mxu0 0.0
        %910 = vmatpush1.xpose.msra.mxu0 0.0
        %911 = vmatprep.subr.mxu0 0.0
        %912 = vmatpush1.xpose.msra.mxu0 0.0
        %913 = vmatprep.subr.mxu0 0.0
        %914 = vmatpush1.xpose.msra.mxu0 0.0
        %915 = vmatprep.subr.mxu0 0.0
        %916 = vmatpush1.xpose.msra.mxu0 0.0
        %917 = vmatprep.subr.mxu0 0.0
        %918 = vmatpush1.xpose.msra.mxu0 0.0
        %919 = vmatprep.subr.mxu0 0.0
        %920 = vmatpush1.xpose.msra.mxu0 0.0
        %921 = vmatprep.subr.mxu0 0.0
        %922 = vmatpush1.xpose.msra.mxu0 0.0
        %923 = vmatprep.subr.mxu0 0.0
        %924 = vmatpush1.xpose.msra.mxu0 0.0
        %925 = vmatprep.subr.mxu0 0.0
        %926 = vmatpush1.xpose.msra.mxu0 0.0
        %927 = vmatprep.mubr.f32.mxu0 0.0
        %v928 = vand.u32 %v373, 4294901760
        %v929 = vsub.f32 %v373, %v928
        %v930 = vand.u32 %v929, 4294901760
        %931 = vmatmul.mubr.f32.gmra.mrb[0].mxu0 %v930
        %v932 = vpop.f32.mrb[0].mxu0
        %v933 = vadd.f32 %v823, %v932
        %v934 = vpop.f32.mrb[0].mxu0
        %935 = vmatprep.mubr.f32.mxu0 0.0
        %v936 = vand.u32 %v376, 4294901760
        %v937 = vsub.f32 %v376, %v936
        %v938 = vand.u32 %v937, 4294901760
        %939 = vmatmul.mubr.f32.gmra.mrb[0].mxu0 %v938
        %v940 = vpop.f32.mrb[0].mxu0
        %v941 = vadd.f32 %v830, %v940
        %v942 = vpop.f32.mrb[0].mxu0
        %943 = vmatprep.mubr.f32.mxu0 0.0
        %v944 = vand.u32 %v379, 4294901760
        %v945 = vsub.f32 %v379, %v944
        %v946 = vand.u32 %v945, 4294901760
        %947 = vmatmul.mubr.f32.gmra.mrb[0].mxu0 %v946
        %v948 = vpop.f32.mrb[0].mxu0
        %v949 = vadd.f32 %v837, %v948
        %v950 = vpop.f32.mrb[0].mxu0
        %951 = vmatprep.mubr.f32.mxu0 0.0
        %v952 = vand.u32 %v382, 4294901760
        %v953 = vsub.f32 %v382, %v952
        %v954 = vand.u32 %v953, 4294901760
        %955 = vmatmul.mubr.f32.gmra.mrb[0].mxu0 %v954
        %v956 = vpop.f32.mrb[0].mxu0
        %v957 = vadd.f32 %v844, %v956
        %v958 = vpop.f32.mrb[0].mxu0
        %959 = vdwg.mxu0
        %960 = vmatprep.subr.mxu0 0.0
        %v961 = vand.u32 %v385, 4294901760
        %v962 = vsub.f32 %v385, %v961
        %v963 = vand.u32 %v962, 4294901760
        %964 = vmatpush1.xpose.msra.mxu0 %v963
        %965 = vmatprep.subr.mxu0 0.0
        %v966 = vand.u32 %v388, 4294901760
        %v967 = vsub.f32 %v388, %v966
        %v968 = vand.u32 %v967, 4294901760
        %969 = vmatpush1.xpose.msra.mxu0 %v968
        %970 = vmatprep.subr.mxu0 0.0
        %v971 = vand.u32 %v391, 4294901760
        %v972 = vsub.f32 %v391, %v971
        %v973 = vand.u32 %v972, 4294901760
        %974 = vmatpush1.xpose.msra.mxu0 %v973
        %975 = vmatprep.subr.mxu0 0.0
        %v976 = vand.u32 %v394, 4294901760
        %v977 = vsub.f32 %v394, %v976
        %v978 = vand.u32 %v977, 4294901760
        %979 = vmatpush1.xpose.msra.mxu0 %v978
        %980 = vmatprep.subr.mxu0 0.0
        %v981 = vand.u32 %v397, 4294901760
        %v982 = vsub.f32 %v397, %v981
        %v983 = vand.u32 %v982, 4294901760
        %984 = vmatpush1.xpose.msra.mxu0 %v983
        %985 = vmatprep.subr.mxu0 0.0
        %v986 = vand.u32 %v400, 4294901760
        %v987 = vsub.f32 %v400, %v986
        %v988 = vand.u32 %v987, 4294901760
        %989 = vmatpush1.xpose.msra.mxu0 %v988
        %990 = vmatprep.subr.mxu0 0.0
        %v991 = vand.u32 %v403, 4294901760
        %v992 = vsub.f32 %v403, %v991
        %v993 = vand.u32 %v992, 4294901760
        %994 = vmatpush1.xpose.msra.mxu0 %v993
        %995 = vmatprep.subr.mxu0 0.0
        %v996 = vand.u32 %v406, 4294901760
        %v997 = vsub.f32 %v406, %v996
        %v998 = vand.u32 %v997, 4294901760
        %999 = vmatpush1.xpose.msra.mxu0 %v998
        %1000 = vmatprep.subr.mxu0 0.0
        %v1001 = vand.u32 %v409, 4294901760
        %v1002 = vsub.f32 %v409, %v1001
        %v1003 = vand.u32 %v1002, 4294901760
        %1004 = vmatpush1.xpose.msra.mxu0 %v1003
        %1005 = vmatprep.subr.mxu0 0.0
        %v1006 = vand.u32 %v412, 4294901760
        %v1007 = vsub.f32 %v412, %v1006
        %v1008 = vand.u32 %v1007, 4294901760
        %1009 = vmatpush1.xpose.msra.mxu0 %v1008
        %1010 = vmatprep.subr.mxu0 0.0
        %v1011 = vand.u32 %v415, 4294901760
        %v1012 = vsub.f32 %v415, %v1011
        %v1013 = vand.u32 %v1012, 4294901760
        %1014 = vmatpush1.xpose.msra.mxu0 %v1013
        %1015 = vmatprep.subr.mxu0 0.0
        %v1016 = vand.u32 %v418, 4294901760
        %v1017 = vsub.f32 %v418, %v1016
        %v1018 = vand.u32 %v1017, 4294901760
        %1019 = vmatpush1.xpose.msra.mxu0 %v1018
        %1020 = vmatprep.subr.mxu0 0.0
        %v1021 = vand.u32 %v421, 4294901760
        %v1022 = vsub.f32 %v421, %v1021
        %v1023 = vand.u32 %v1022, 4294901760
        %1024 = vmatpush1.xpose.msra.mxu0 %v1023
        %1025 = vmatprep.subr.mxu0 0.0
        %v1026 = vand.u32 %v424, 4294901760
        %v1027 = vsub.f32 %v424, %v1026
        %v1028 = vand.u32 %v1027, 4294901760
        %1029 = vmatpush1.xpose.msra.mxu0 %v1028
        %1030 = vmatprep.subr.mxu0 0.0
        %v1031 = vand.u32 %v427, 4294901760
        %v1032 = vsub.f32 %v427, %v1031
        %v1033 = vand.u32 %v1032, 4294901760
        %1034 = vmatpush1.xpose.msra.mxu0 %v1033
        %1035 = vmatprep.subr.mxu0 0.0
        %v1036 = vand.u32 %v430, 4294901760
        %v1037 = vsub.f32 %v430, %v1036
        %v1038 = vand.u32 %v1037, 4294901760
        %1039 = vmatpush1.xpose.msra.mxu0 %v1038
        %1040 = vmatprep.subr.mxu0 0.0
        %1041 = vmatpush1.xpose.msra.mxu0 0.0
        %1042 = vmatprep.subr.mxu0 0.0
        %1043 = vmatpush1.xpose.msra.mxu0 0.0
        %1044 = vmatprep.subr.mxu0 0.0
        %1045 = vmatpush1.xpose.msra.mxu0 0.0
        %1046 = vmatprep.subr.mxu0 0.0
        %1047 = vmatpush1.xpose.msra.mxu0 0.0
        %1048 = vmatprep.subr.mxu0 0.0
        %1049 = vmatpush1.xpose.msra.mxu0 0.0
        %1050 = vmatprep.subr.mxu0 0.0
        %1051 = vmatpush1.xpose.msra.mxu0 0.0
        %1052 = vmatprep.subr.mxu0 0.0
        %1053 = vmatpush1.xpose.msra.mxu0 0.0
        %1054 = vmatprep.subr.mxu0 0.0
        %1055 = vmatpush1.xpose.msra.mxu0 0.0
        %1056 = vmatprep.subr.mxu0 0.0
        %1057 = vmatpush1.xpose.msra.mxu0 0.0
        %1058 = vmatprep.subr.mxu0 0.0
        %1059 = vmatpush1.xpose.msra.mxu0 0.0
        %1060 = vmatprep.subr.mxu0 0.0
        %1061 = vmatpush1.xpose.msra.mxu0 0.0
        %1062 = vmatprep.subr.mxu0 0.0
        %1063 = vmatpush1.xpose.msra.mxu0 0.0
        %1064 = vmatprep.subr.mxu0 0.0
        %1065 = vmatpush1.xpose.msra.mxu0 0.0
        %1066 = vmatprep.subr.mxu0 0.0
        %1067 = vmatpush1.xpose.msra.mxu0 0.0
        %1068 = vmatprep.subr.mxu0 0.0
        %1069 = vmatpush1.xpose.msra.mxu0 0.0
        %1070 = vmatprep.subr.mxu0 0.0
        %1071 = vmatpush1.xpose.msra.mxu0 0.0
        %1072 = vmatprep.mubr.f32.mxu0 0.0
        %v1073 = vand.u32 %v373, 4294901760
        %1074 = vmatmul.mubr.f32.gmra.mrb[0].mxu0 %v1073
        %v1075 = vpop.f32.mrb[0].mxu0
        %v1076 = vadd.f32 %v933, %v1075
        %v1077 = vpop.f32.mrb[0].mxu0
        %1078 = vmatprep.mubr.f32.mxu0 0.0
        %v1079 = vand.u32 %v376, 4294901760
        %1080 = vmatmul.mubr.f32.gmra.mrb[0].mxu0 %v1079
        %v1081 = vpop.f32.mrb[0].mxu0
        %v1082 = vadd.f32 %v941, %v1081
        %v1083 = vpop.f32.mrb[0].mxu0
        %1084 = vmatprep.mubr.f32.mxu0 0.0
        %v1085 = vand.u32 %v379, 4294901760
        %1086 = vmatmul.mubr.f32.gmra.mrb[0].mxu0 %v1085
        %v1087 = vpop.f32.mrb[0].mxu0
        %v1088 = vadd.f32 %v949, %v1087
        %v1089 = vpop.f32.mrb[0].mxu0
        %1090 = vmatprep.mubr.f32.mxu0 0.0
        %v1091 = vand.u32 %v382, 4294901760
        %1092 = vmatmul.mubr.f32.gmra.mrb[0].mxu0 %v1091
        %v1093 = vpop.f32.mrb[0].mxu0
        %v1094 = vadd.f32 %v957, %v1093
        %v1095 = vpop.f32.mrb[0].mxu0
        %1096 = vdwg.mxu0
        %1097 = vmatprep.subr.mxu0 0.0
        %v1098 = vand.u32 %v385, 4294901760
        %1099 = vmatpush1.xpose.msra.mxu0 %v1098
        %1100 = vmatprep.subr.mxu0 0.0
        %v1101 = vand.u32 %v388, 4294901760
        %1102 = vmatpush1.xpose.msra.mxu0 %v1101
        %1103 = vmatprep.subr.mxu0 0.0
        %v1104 = vand.u32 %v391, 4294901760
        %1105 = vmatpush1.xpose.msra.mxu0 %v1104
        %1106 = vmatprep.subr.mxu0 0.0
        %v1107 = vand.u32 %v394, 4294901760
        %1108 = vmatpush1.xpose.msra.mxu0 %v1107
        %1109 = vmatprep.subr.mxu0 0.0
        %v1110 = vand.u32 %v397, 4294901760
        %1111 = vmatpush1.xpose.msra.mxu0 %v1110
        %1112 = vmatprep.subr.mxu0 0.0
        %v1113 = vand.u32 %v400, 4294901760
        %1114 = vmatpush1.xpose.msra.mxu0 %v1113
        %1115 = vmatprep.subr.mxu0 0.0
        %v1116 = vand.u32 %v403, 4294901760
        %1117 = vmatpush1.xpose.msra.mxu0 %v1116
        %1118 = vmatprep.subr.mxu0 0.0
        %v1119 = vand.u32 %v406, 4294901760
        %1120 = vmatpush1.xpose.msra.mxu0 %v1119
        %1121 = vmatprep.subr.mxu0 0.0
        %v1122 = vand.u32 %v409, 4294901760
        %1123 = vmatpush1.xpose.msra.mxu0 %v1122
        %1124 = vmatprep.subr.mxu0 0.0
        %v1125 = vand.u32 %v412, 4294901760
        %1126 = vmatpush1.xpose.msra.mxu0 %v1125
        %1127 = vmatprep.subr.mxu0 0.0
        %v1128 = vand.u32 %v415, 4294901760
        %1129 = vmatpush1.xpose.msra.mxu0 %v1128
        %1130 = vmatprep.subr.mxu0 0.0
        %v1131 = vand.u32 %v418, 4294901760
        %1132 = vmatpush1.xpose.msra.mxu0 %v1131
        %1133 = vmatprep.subr.mxu0 0.0
        %v1134 = vand.u32 %v421, 4294901760
        %1135 = vmatpush1.xpose.msra.mxu0 %v1134
        %1136 = vmatprep.subr.mxu0 0.0
        %v1137 = vand.u32 %v424, 4294901760
        %1138 = vmatpush1.xpose.msra.mxu0 %v1137
        %1139 = vmatprep.subr.mxu0 0.0
        %v1140 = vand.u32 %v427, 4294901760
        %1141 = vmatpush1.xpose.msra.mxu0 %v1140
        %1142 = vmatprep.subr.mxu0 0.0
        %v1143 = vand.u32 %v430, 4294901760
        %1144 = vmatpush1.xpose.msra.mxu0 %v1143
        %1145 = vmatprep.subr.mxu0 0.0
        %1146 = vmatpush1.xpose.msra.mxu0 0.0
        %1147 = vmatprep.subr.mxu0 0.0
        %1148 = vmatpush1.xpose.msra.mxu0 0.0
        %1149 = vmatprep.subr.mxu0 0.0
        %1150 = vmatpush1.xpose.msra.mxu0 0.0
        %1151 = vmatprep.subr.mxu0 0.0
        %1152 = vmatpush1.xpose.msra.mxu0 0.0
        %1153 = vmatprep.subr.mxu0 0.0
        %1154 = vmatpush1.xpose.msra.mxu0 0.0
        %1155 = vmatprep.subr.mxu0 0.0
        %1156 = vmatpush1.xpose.msra.mxu0 0.0
        %1157 = vmatprep.subr.mxu0 0.0
        %1158 = vmatpush1.xpose.msra.mxu0 0.0
        %1159 = vmatprep.subr.mxu0 0.0
        %1160 = vmatpush1.xpose.msra.mxu0 0.0
        %1161 = vmatprep.subr.mxu0 0.0
        %1162 = vmatpush1.xpose.msra.mxu0 0.0
        %1163 = vmatprep.subr.mxu0 0.0
        %1164 = vmatpush1.xpose.msra.mxu0 0.0
        %1165 = vmatprep.subr.mxu0 0.0
        %1166 = vmatpush1.xpose.msra.mxu0 0.0
        %1167 = vmatprep.subr.mxu0 0.0
        %1168 = vmatpush1.xpose.msra.mxu0 0.0
        %1169 = vmatprep.subr.mxu0 0.0
        %1170 = vmatpush1.xpose.msra.mxu0 0.0
        %1171 = vmatprep.subr.mxu0 0.0
        %1172 = vmatpush1.xpose.msra.mxu0 0.0
        %1173 = vmatprep.subr.mxu0 0.0
        %1174 = vmatpush1.xpose.msra.mxu0 0.0
        %1175 = vmatprep.subr.mxu0 0.0
        %1176 = vmatpush1.xpose.msra.mxu0 0.0
        %1177 = vmatprep.mubr.f32.mxu0 0.0
        %v1178 = vand.u32 %v373, 4294901760
        %1179 = vmatmul.mubr.f32.gmra.mrb[0].mxu0 %v1178
        %v1180 = vpop.f32.mrb[0].mxu0
        %v1181 = vadd.f32 %v1076, %v1180
        %v1182 = vpop.f32.mrb[0].mxu0
        %1183 = vmatprep.mubr.f32.mxu0 0.0
        %v1184 = vand.u32 %v376, 4294901760
        %1185 = vmatmul.mubr.f32.gmra.mrb[0].mxu0 %v1184
        %v1186 = vpop.f32.mrb[0].mxu0
        %v1187 = vadd.f32 %v1082, %v1186
        %v1188 = vpop.f32.mrb[0].mxu0
        %1189 = vmatprep.mubr.f32.mxu0 0.0
        %v1190 = vand.u32 %v379, 4294901760
        %1191 = vmatmul.mubr.f32.gmra.mrb[0].mxu0 %v1190
        %v1192 = vpop.f32.mrb[0].mxu0
        %v1193 = vadd.f32 %v1088, %v1192
        %v1194 = vpop.f32.mrb[0].mxu0
        %1195 = vmatprep.mubr.f32.mxu0 0.0
        %v1196 = vand.u32 %v382, 4294901760
        %1197 = vmatmul.mubr.f32.gmra.mrb[0].mxu0 %v1196
        %v1198 = vpop.f32.mrb[0].mxu0
        %v1199 = vadd.f32 %v1094, %v1198
        %v1200 = vpop.f32.mrb[0].mxu0
        %1201 = vdwg.mxu0
        %1203 = vset.pattern.permute.xlu0 0
        %1204 = vperm.xlu0 %1203, %v347
        %v1205 = vpop.permute.xlu0 %1204
        %1208 = vset.pattern.permute.xlu0 0
        %1209 = vperm.xlu0 %1208, %v348
        %v1210 = vpop.permute.xlu0 %1209
        %1213 = vset.pattern.permute.xlu0 0
        %1214 = vperm.xlu0 %1213, %v349
        %v1215 = vpop.permute.xlu0 %1214
        %1218 = vset.pattern.permute.xlu0 0
        %1219 = vperm.xlu0 %1218, %v350
        %v1220 = vpop.permute.xlu0 %1219
        %v1223 = vlaneseq
        %v1224 = vshrl.u32 %v1223, 7
        %v1225 = vsub.s32 0, %v1224
        %v1226 = vrot.slane %v370, %v1225
        %v1228 = vadd.f32 %v1205, %v1226
        %v1229 = vadd.f32 %v1210, %v1226
        %v1230 = vadd.f32 %v1215, %v1226
        %v1231 = vadd.f32 %v1220, %v1226
        %v1232 = vmul.f32 %v1181, 2.0
        %v1233 = vmul.f32 %v1187, 2.0
        %v1234 = vmul.f32 %v1193, 2.0
        %v1235 = vmul.f32 %v1199, 2.0
        %v1236 = vsub.f32 %v1228, %v1232
        %v1237 = vsub.f32 %v1229, %v1233
        %v1238 = vsub.f32 %v1230, %v1234
        %v1239 = vsub.f32 %v1231, %v1235
        %1240 = vmin.xlane.f32.xlu0 %v1236
        %v1241 = vpop.xlane.xlu0 %1240
        %1242 = vmin.xlane.f32.xlu0 %v1237
        %v1243 = vpop.xlane.xlu0 %1242
        %1244 = vmin.xlane.f32.xlu0 %v1238
        %v1245 = vpop.xlane.xlu0 %1244
        %1246 = vmin.xlane.f32.xlu0 %v1239
        %v1247 = vpop.xlane.xlu0 %1246
        %v1248 = vlaneseq
        %v1249 = vand.u32 %v1248, 127
        %vm1250 = vcmp.eq.f32.partialorder %v1236, %v1241
        %vm1251 = vcmp.eq.f32.partialorder %v1237, %v1243
        %vm1252 = vcmp.eq.f32.partialorder %v1238, %v1245
        %vm1253 = vcmp.eq.f32.partialorder %v1239, %v1247
        %v1254 = vsel %vm1250, %v1249, 128
        %v1255 = vsel %vm1251, %v1249, 128
        %v1256 = vsel %vm1252, %v1249, 128
        %v1257 = vsel %vm1253, %v1249, 128
        %v1258 = vand.u32 %v1254, 65535
        %v1259 = vshra.s32 %v1254, 16
        %v1260 = vcvt.s32.f32 %v1258
        %v1261 = vcvt.s32.f32 %v1259
        %1262 = vmin.xlane.f32.xlu0 %v1261
        %v1263 = vpop.xlane.xlu0 %1262
        %vm1264 = vcmp.eq.f32.partialorder %v1261, %v1263
        %v1265 = vsel %vm1264, %v1260, inf
        %1266 = vmin.xlane.f32.xlu0 %v1265
        %v1267 = vpop.xlane.xlu0 %1266
        %v1268 = vcvt.f32.s32 %v1267
        %v1269 = vcvt.f32.s32 %v1263
        %v1270 = vshll.u32 %v1269, 16
        %v1271 = vadd.s32 %v1270, %v1268
        %v1272 = vand.u32 %v1255, 65535
        %v1273 = vshra.s32 %v1255, 16
        %v1274 = vcvt.s32.f32 %v1272
        %v1275 = vcvt.s32.f32 %v1273
        %1276 = vmin.xlane.f32.xlu0 %v1275
        %v1277 = vpop.xlane.xlu0 %1276
        %vm1278 = vcmp.eq.f32.partialorder %v1275, %v1277
        %v1279 = vsel %vm1278, %v1274, inf
        %1280 = vmin.xlane.f32.xlu0 %v1279
        %v1281 = vpop.xlane.xlu0 %1280
        %v1282 = vcvt.f32.s32 %v1281
        %v1283 = vcvt.f32.s32 %v1277
        %v1284 = vshll.u32 %v1283, 16
        %v1285 = vadd.s32 %v1284, %v1282
        %v1286 = vand.u32 %v1256, 65535
        %v1287 = vshra.s32 %v1256, 16
        %v1288 = vcvt.s32.f32 %v1286
        %v1289 = vcvt.s32.f32 %v1287
        %1290 = vmin.xlane.f32.xlu0 %v1289
        %v1291 = vpop.xlane.xlu0 %1290
        %vm1292 = vcmp.eq.f32.partialorder %v1289, %v1291
        %v1293 = vsel %vm1292, %v1288, inf
        %1294 = vmin.xlane.f32.xlu0 %v1293
        %v1295 = vpop.xlane.xlu0 %1294
        %v1296 = vcvt.f32.s32 %v1295
        %v1297 = vcvt.f32.s32 %v1291
        %v1298 = vshll.u32 %v1297, 16
        %v1299 = vadd.s32 %v1298, %v1296
        %v1300 = vand.u32 %v1257, 65535
        %v1301 = vshra.s32 %v1257, 16
        %v1302 = vcvt.s32.f32 %v1300
        %v1303 = vcvt.s32.f32 %v1301
        %1304 = vmin.xlane.f32.xlu0 %v1303
        %v1305 = vpop.xlane.xlu0 %1304
        %vm1306 = vcmp.eq.f32.partialorder %v1303, %v1305
        %v1307 = vsel %vm1306, %v1302, inf
        %1308 = vmin.xlane.f32.xlu0 %v1307
        %v1309 = vpop.xlane.xlu0 %1308
        %v1310 = vcvt.f32.s32 %v1309
        %v1311 = vcvt.f32.s32 %v1305
        %v1312 = vshll.u32 %v1311, 16
        %v1313 = vadd.s32 %v1312, %v1310
        %vm1314 = vcmp.eq.s32.totalorder %v1249, %v1271
        %vm1315 = vcmp.eq.s32.totalorder %v1249, %v1285
        %vm1316 = vcmp.eq.s32.totalorder %v1249, %v1299
        %vm1317 = vcmp.eq.s32.totalorder %v1249, %v1313
        %v1318 = vsel %vm1314, 1, 0
        %v1319 = vsel %vm1315, 1, 0
        %v1320 = vsel %vm1316, 1, 0
        %v1321 = vsel %vm1317, 1, 0
        %v1322 = vcvt.s32.f32 %v1318
        %v1323 = vcvt.s32.f32 %v1319
        %v1324 = vcvt.s32.f32 %v1320
        %v1325 = vcvt.s32.f32 %v1321
        %1326 = vmatprep.subr.mxu0 0.0
        %v1327 = vand.u32 %v353, 4294901760
        %1328 = vmatpush1.msra.mxu0 %v1327
        %1329 = vmatprep.subr.mxu0 0.0
        %v1330 = vand.u32 %v354, 4294901760
        %1331 = vmatpush1.msra.mxu0 %v1330
        %1332 = vmatprep.subr.mxu0 0.0
        %v1333 = vand.u32 %v355, 4294901760
        %1334 = vmatpush1.msra.mxu0 %v1333
        %1335 = vmatprep.subr.mxu0 0.0
        %v1336 = vand.u32 %v356, 4294901760
        %1337 = vmatpush1.msra.mxu0 %v1336
        %1338 = vmatprep.subr.mxu0 0.0
        %v1339 = vand.u32 %v357, 4294901760
        %1340 = vmatpush1.msra.mxu0 %v1339
        %1341 = vmatprep.subr.mxu0 0.0
        %v1342 = vand.u32 %v358, 4294901760
        %1343 = vmatpush1.msra.mxu0 %v1342
        %1344 = vmatprep.subr.mxu0 0.0
        %v1345 = vand.u32 %v359, 4294901760
        %1346 = vmatpush1.msra.mxu0 %v1345
        %1347 = vmatprep.subr.mxu0 0.0
        %v1348 = vand.u32 %v360, 4294901760
        %1349 = vmatpush1.msra.mxu0 %v1348
        %1350 = vmatprep.subr.mxu0 0.0
        %v1351 = vand.u32 %v361, 4294901760
        %1352 = vmatpush1.msra.mxu0 %v1351
        %1353 = vmatprep.subr.mxu0 0.0
        %v1354 = vand.u32 %v362, 4294901760
        %1355 = vmatpush1.msra.mxu0 %v1354
        %1356 = vmatprep.subr.mxu0 0.0
        %v1357 = vand.u32 %v363, 4294901760
        %1358 = vmatpush1.msra.mxu0 %v1357
        %1359 = vmatprep.subr.mxu0 0.0
        %v1360 = vand.u32 %v364, 4294901760
        %1361 = vmatpush1.msra.mxu0 %v1360
        %1362 = vmatprep.subr.mxu0 0.0
        %v1363 = vand.u32 %v365, 4294901760
        %1364 = vmatpush1.msra.mxu0 %v1363
        %1365 = vmatprep.subr.mxu0 0.0
        %v1366 = vand.u32 %v366, 4294901760
        %1367 = vmatpush1.msra.mxu0 %v1366
        %1368 = vmatprep.subr.mxu0 0.0
        %v1369 = vand.u32 %v367, 4294901760
        %1370 = vmatpush1.msra.mxu0 %v1369
        %1371 = vmatprep.subr.mxu0 0.0
        %v1372 = vand.u32 %v368, 4294901760
        %1373 = vmatpush1.msra.mxu0 %v1372
        %1374 = vmatprep.subr.mxu0 0.0
        %1375 = vmatpush1.msra.mxu0 0.0
        %1376 = vmatprep.subr.mxu0 0.0
        %1377 = vmatpush1.msra.mxu0 0.0
        %1378 = vmatprep.subr.mxu0 0.0
        %1379 = vmatpush1.msra.mxu0 0.0
        %1380 = vmatprep.subr.mxu0 0.0
        %1381 = vmatpush1.msra.mxu0 0.0
        %1382 = vmatprep.subr.mxu0 0.0
        %1383 = vmatpush1.msra.mxu0 0.0
        %1384 = vmatprep.subr.mxu0 0.0
        %1385 = vmatpush1.msra.mxu0 0.0
        %1386 = vmatprep.subr.mxu0 0.0
        %1387 = vmatpush1.msra.mxu0 0.0
        %1388 = vmatprep.subr.mxu0 0.0
        %1389 = vmatpush1.msra.mxu0 0.0
        %1390 = vmatprep.subr.mxu0 0.0
        %1391 = vmatpush1.msra.mxu0 0.0
        %1392 = vmatprep.subr.mxu0 0.0
        %1393 = vmatpush1.msra.mxu0 0.0
        %1394 = vmatprep.subr.mxu0 0.0
        %1395 = vmatpush1.msra.mxu0 0.0
        %1396 = vmatprep.subr.mxu0 0.0
        %1397 = vmatpush1.msra.mxu0 0.0
        %1398 = vmatprep.subr.mxu0 0.0
        %1399 = vmatpush1.msra.mxu0 0.0
        %1400 = vmatprep.subr.mxu0 0.0
        %1401 = vmatpush1.msra.mxu0 0.0
        %1402 = vmatprep.subr.mxu0 0.0
        %1403 = vmatpush1.msra.mxu0 0.0
        %1404 = vmatprep.subr.mxu0 0.0
        %1405 = vmatpush1.msra.mxu0 0.0
        %1406 = vmatprep.mubr.f32.mxu0 0.0
        %v1407 = vand.u32 %v1322, 4294901760
        %v1408 = vsub.f32 %v1322, %v1407
        %v1409 = vand.u32 %v1408, 4294901760
        %v1410 = vsub.f32 %v1408, %v1409
        %v1411 = vand.u32 %v1410, 4294901760
        %1412 = vmatmul.mubr.f32.gmra.mrb[0].mxu0 %v1411
        %v1413 = vpop.f32.mrb[0].mxu0
        %v1414 = vadd.f32 0.0, %v1413
        %v1415 = vpop.f32.mrb[0].mxu0
        %1416 = vmatprep.mubr.f32.mxu0 0.0
        %v1417 = vand.u32 %v1323, 4294901760
        %v1418 = vsub.f32 %v1323, %v1417
        %v1419 = vand.u32 %v1418, 4294901760
        %v1420 = vsub.f32 %v1418, %v1419
        %v1421 = vand.u32 %v1420, 4294901760
        %1422 = vmatmul.mubr.f32.gmra.mrb[0].mxu0 %v1421
        %v1423 = vpop.f32.mrb[0].mxu0
        %v1424 = vadd.f32 0.0, %v1423
        %v1425 = vpop.f32.mrb[0].mxu0
        %1426 = vmatprep.mubr.f32.mxu0 0.0
        %v1427 = vand.u32 %v1324, 4294901760
        %v1428 = vsub.f32 %v1324, %v1427
        %v1429 = vand.u32 %v1428, 4294901760
        %v1430 = vsub.f32 %v1428, %v1429
        %v1431 = vand.u32 %v1430, 4294901760
        %1432 = vmatmul.mubr.f32.gmra.mrb[0].mxu0 %v1431
        %v1433 = vpop.f32.mrb[0].mxu0
        %v1434 = vadd.f32 0.0, %v1433
        %v1435 = vpop.f32.mrb[0].mxu0
        %1436 = vmatprep.mubr.f32.mxu0 0.0
        %v1437 = vand.u32 %v1325, 4294901760
        %v1438 = vsub.f32 %v1325, %v1437
        %v1439 = vand.u32 %v1438, 4294901760
        %v1440 = vsub.f32 %v1438, %v1439
        %v1441 = vand.u32 %v1440, 4294901760
        %1442 = vmatmul.mubr.f32.gmra.mrb[0].mxu0 %v1441
        %v1443 = vpop.f32.mrb[0].mxu0
        %v1444 = vadd.f32 0.0, %v1443
        %v1445 = vpop.f32.mrb[0].mxu0
        %1446 = vdwg.mxu0
        %1447 = vmatprep.subr.mxu0 0.0
        %v1448 = vand.u32 %v353, 4294901760
        %v1449 = vsub.f32 %v353, %v1448
        %v1450 = vand.u32 %v1449, 4294901760
        %v1451 = vsub.f32 %v1449, %v1450
        %v1452 = vand.u32 %v1451, 4294901760
        %1453 = vmatpush1.msra.mxu0 %v1452
        %1454 = vmatprep.subr.mxu0 0.0
        %v1455 = vand.u32 %v354, 4294901760
        %v1456 = vsub.f32 %v354, %v1455
        %v1457 = vand.u32 %v1456, 4294901760
        %v1458 = vsub.f32 %v1456, %v1457
        %v1459 = vand.u32 %v1458, 4294901760
        %1460 = vmatpush1.msra.mxu0 %v1459
        %1461 = vmatprep.subr.mxu0 0.0
        %v1462 = vand.u32 %v355, 4294901760
        %v1463 = vsub.f32 %v355, %v1462
        %v1464 = vand.u32 %v1463, 4294901760
        %v1465 = vsub.f32 %v1463, %v1464
        %v1466 = vand.u32 %v1465, 4294901760
        %1467 = vmatpush1.msra.mxu0 %v1466
        %1468 = vmatprep.subr.mxu0 0.0
        %v1469 = vand.u32 %v356, 4294901760
        %v1470 = vsub.f32 %v356, %v1469
        %v1471 = vand.u32 %v1470, 4294901760
        %v1472 = vsub.f32 %v1470, %v1471
        %v1473 = vand.u32 %v1472, 4294901760
        %1474 = vmatpush1.msra.mxu0 %v1473
        %1475 = vmatprep.subr.mxu0 0.0
        %v1476 = vand.u32 %v357, 4294901760
        %v1477 = vsub.f32 %v357, %v1476
        %v1478 = vand.u32 %v1477, 4294901760
        %v1479 = vsub.f32 %v1477, %v1478
        %v1480 = vand.u32 %v1479, 4294901760
        %1481 = vmatpush1.msra.mxu0 %v1480
        %1482 = vmatprep.subr.mxu0 0.0
        %v1483 = vand.u32 %v358, 4294901760
        %v1484 = vsub.f32 %v358, %v1483
        %v1485 = vand.u32 %v1484, 4294901760
        %v1486 = vsub.f32 %v1484, %v1485
        %v1487 = vand.u32 %v1486, 4294901760
        %1488 = vmatpush1.msra.mxu0 %v1487
        %1489 = vmatprep.subr.mxu0 0.0
        %v1490 = vand.u32 %v359, 4294901760
        %v1491 = vsub.f32 %v359, %v1490
        %v1492 = vand.u32 %v1491, 4294901760
        %v1493 = vsub.f32 %v1491, %v1492
        %v1494 = vand.u32 %v1493, 4294901760
        %1495 = vmatpush1.msra.mxu0 %v1494
        %1496 = vmatprep.subr.mxu0 0.0
        %v1497 = vand.u32 %v360, 4294901760
        %v1498 = vsub.f32 %v360, %v1497
        %v1499 = vand.u32 %v1498, 4294901760
        %v1500 = vsub.f32 %v1498, %v1499
        %v1501 = vand.u32 %v1500, 4294901760
        %1502 = vmatpush1.msra.mxu0 %v1501
        %1503 = vmatprep.subr.mxu0 0.0
        %v1504 = vand.u32 %v361, 4294901760
        %v1505 = vsub.f32 %v361, %v1504
        %v1506 = vand.u32 %v1505, 4294901760
        %v1507 = vsub.f32 %v1505, %v1506
        %v1508 = vand.u32 %v1507, 4294901760
        %1509 = vmatpush1.msra.mxu0 %v1508
        %1510 = vmatprep.subr.mxu0 0.0
        %v1511 = vand.u32 %v362, 4294901760
        %v1512 = vsub.f32 %v362, %v1511
        %v1513 = vand.u32 %v1512, 4294901760
        %v1514 = vsub.f32 %v1512, %v1513
        %v1515 = vand.u32 %v1514, 4294901760
        %1516 = vmatpush1.msra.mxu0 %v1515
        %1517 = vmatprep.subr.mxu0 0.0
        %v1518 = vand.u32 %v363, 4294901760
        %v1519 = vsub.f32 %v363, %v1518
        %v1520 = vand.u32 %v1519, 4294901760
        %v1521 = vsub.f32 %v1519, %v1520
        %v1522 = vand.u32 %v1521, 4294901760
        %1523 = vmatpush1.msra.mxu0 %v1522
        %1524 = vmatprep.subr.mxu0 0.0
        %v1525 = vand.u32 %v364, 4294901760
        %v1526 = vsub.f32 %v364, %v1525
        %v1527 = vand.u32 %v1526, 4294901760
        %v1528 = vsub.f32 %v1526, %v1527
        %v1529 = vand.u32 %v1528, 4294901760
        %1530 = vmatpush1.msra.mxu0 %v1529
        %1531 = vmatprep.subr.mxu0 0.0
        %v1532 = vand.u32 %v365, 4294901760
        %v1533 = vsub.f32 %v365, %v1532
        %v1534 = vand.u32 %v1533, 4294901760
        %v1535 = vsub.f32 %v1533, %v1534
        %v1536 = vand.u32 %v1535, 4294901760
        %1537 = vmatpush1.msra.mxu0 %v1536
        %1538 = vmatprep.subr.mxu0 0.0
        %v1539 = vand.u32 %v366, 4294901760
        %v1540 = vsub.f32 %v366, %v1539
        %v1541 = vand.u32 %v1540, 4294901760
        %v1542 = vsub.f32 %v1540, %v1541
        %v1543 = vand.u32 %v1542, 4294901760
        %1544 = vmatpush1.msra.mxu0 %v1543
        %1545 = vmatprep.subr.mxu0 0.0
        %v1546 = vand.u32 %v367, 4294901760
        %v1547 = vsub.f32 %v367, %v1546
        %v1548 = vand.u32 %v1547, 4294901760
        %v1549 = vsub.f32 %v1547, %v1548
        %v1550 = vand.u32 %v1549, 4294901760
        %1551 = vmatpush1.msra.mxu0 %v1550
        %1552 = vmatprep.subr.mxu0 0.0
        %v1553 = vand.u32 %v368, 4294901760
        %v1554 = vsub.f32 %v368, %v1553
        %v1555 = vand.u32 %v1554, 4294901760
        %v1556 = vsub.f32 %v1554, %v1555
        %v1557 = vand.u32 %v1556, 4294901760
        %1558 = vmatpush1.msra.mxu0 %v1557
        %1559 = vmatprep.subr.mxu0 0.0
        %1560 = vmatpush1.msra.mxu0 0.0
        %1561 = vmatprep.subr.mxu0 0.0
        %1562 = vmatpush1.msra.mxu0 0.0
        %1563 = vmatprep.subr.mxu0 0.0
        %1564 = vmatpush1.msra.mxu0 0.0
        %1565 = vmatprep.subr.mxu0 0.0
        %1566 = vmatpush1.msra.mxu0 0.0
        %1567 = vmatprep.subr.mxu0 0.0
        %1568 = vmatpush1.msra.mxu0 0.0
        %1569 = vmatprep.subr.mxu0 0.0
        %1570 = vmatpush1.msra.mxu0 0.0
        %1571 = vmatprep.subr.mxu0 0.0
        %1572 = vmatpush1.msra.mxu0 0.0
        %1573 = vmatprep.subr.mxu0 0.0
        %1574 = vmatpush1.msra.mxu0 0.0
        %1575 = vmatprep.subr.mxu0 0.0
        %1576 = vmatpush1.msra.mxu0 0.0
        %1577 = vmatprep.subr.mxu0 0.0
        %1578 = vmatpush1.msra.mxu0 0.0
        %1579 = vmatprep.subr.mxu0 0.0
        %1580 = vmatpush1.msra.mxu0 0.0
        %1581 = vmatprep.subr.mxu0 0.0
        %1582 = vmatpush1.msra.mxu0 0.0
        %1583 = vmatprep.subr.mxu0 0.0
        %1584 = vmatpush1.msra.mxu0 0.0
        %1585 = vmatprep.subr.mxu0 0.0
        %1586 = vmatpush1.msra.mxu0 0.0
        %1587 = vmatprep.subr.mxu0 0.0
        %1588 = vmatpush1.msra.mxu0 0.0
        %1589 = vmatprep.subr.mxu0 0.0
        %1590 = vmatpush1.msra.mxu0 0.0
        %1591 = vmatprep.mubr.f32.mxu0 0.0
        %v1592 = vand.u32 %v1322, 4294901760
        %1593 = vmatmul.mubr.f32.gmra.mrb[0].mxu0 %v1592
        %v1594 = vpop.f32.mrb[0].mxu0
        %v1595 = vadd.f32 %v1414, %v1594
        %v1596 = vpop.f32.mrb[0].mxu0
        %1597 = vmatprep.mubr.f32.mxu0 0.0
        %v1598 = vand.u32 %v1323, 4294901760
        %1599 = vmatmul.mubr.f32.gmra.mrb[0].mxu0 %v1598
        %v1600 = vpop.f32.mrb[0].mxu0
        %v1601 = vadd.f32 %v1424, %v1600
        %v1602 = vpop.f32.mrb[0].mxu0
        %1603 = vmatprep.mubr.f32.mxu0 0.0
        %v1604 = vand.u32 %v1324, 4294901760
        %1605 = vmatmul.mubr.f32.gmra.mrb[0].mxu0 %v1604
        %v1606 = vpop.f32.mrb[0].mxu0
        %v1607 = vadd.f32 %v1434, %v1606
        %v1608 = vpop.f32.mrb[0].mxu0
        %1609 = vmatprep.mubr.f32.mxu0 0.0
        %v1610 = vand.u32 %v1325, 4294901760
        %1611 = vmatmul.mubr.f32.gmra.mrb[0].mxu0 %v1610
        %v1612 = vpop.f32.mrb[0].mxu0
        %v1613 = vadd.f32 %v1444, %v1612
        %v1614 = vpop.f32.mrb[0].mxu0
        %1615 = vdwg.mxu0
        %1616 = vmatprep.subr.mxu0 0.0
        %v1617 = vand.u32 %v353, 4294901760
        %v1618 = vsub.f32 %v353, %v1617
        %1619 = vmatpush1.msra.mxu0 %v1618
        %1620 = vmatprep.subr.mxu0 0.0
        %v1621 = vand.u32 %v354, 4294901760
        %v1622 = vsub.f32 %v354, %v1621
        %1623 = vmatpush1.msra.mxu0 %v1622
        %1624 = vmatprep.subr.mxu0 0.0
        %v1625 = vand.u32 %v355, 4294901760
        %v1626 = vsub.f32 %v355, %v1625
        %1627 = vmatpush1.msra.mxu0 %v1626
        %1628 = vmatprep.subr.mxu0 0.0
        %v1629 = vand.u32 %v356, 4294901760
        %v1630 = vsub.f32 %v356, %v1629
        %1631 = vmatpush1.msra.mxu0 %v1630
        %1632 = vmatprep.subr.mxu0 0.0
        %v1633 = vand.u32 %v357, 4294901760
        %v1634 = vsub.f32 %v357, %v1633
        %1635 = vmatpush1.msra.mxu0 %v1634
        %1636 = vmatprep.subr.mxu0 0.0
        %v1637 = vand.u32 %v358, 4294901760
        %v1638 = vsub.f32 %v358, %v1637
        %1639 = vmatpush1.msra.mxu0 %v1638
        %1640 = vmatprep.subr.mxu0 0.0
        %v1641 = vand.u32 %v359, 4294901760
        %v1642 = vsub.f32 %v359, %v1641
        %1643 = vmatpush1.msra.mxu0 %v1642
        %1644 = vmatprep.subr.mxu0 0.0
        %v1645 = vand.u32 %v360, 4294901760
        %v1646 = vsub.f32 %v360, %v1645
        %1647 = vmatpush1.msra.mxu0 %v1646
        %1648 = vmatprep.subr.mxu0 0.0
        %v1649 = vand.u32 %v361, 4294901760
        %v1650 = vsub.f32 %v361, %v1649
        %1651 = vmatpush1.msra.mxu0 %v1650
        %1652 = vmatprep.subr.mxu0 0.0
        %v1653 = vand.u32 %v362, 4294901760
        %v1654 = vsub.f32 %v362, %v1653
        %1655 = vmatpush1.msra.mxu0 %v1654
        %1656 = vmatprep.subr.mxu0 0.0
        %v1657 = vand.u32 %v363, 4294901760
        %v1658 = vsub.f32 %v363, %v1657
        %1659 = vmatpush1.msra.mxu0 %v1658
        %1660 = vmatprep.subr.mxu0 0.0
        %v1661 = vand.u32 %v364, 4294901760
        %v1662 = vsub.f32 %v364, %v1661
        %1663 = vmatpush1.msra.mxu0 %v1662
        %1664 = vmatprep.subr.mxu0 0.0
        %v1665 = vand.u32 %v365, 4294901760
        %v1666 = vsub.f32 %v365, %v1665
        %1667 = vmatpush1.msra.mxu0 %v1666
        %1668 = vmatprep.subr.mxu0 0.0
        %v1669 = vand.u32 %v366, 4294901760
        %v1670 = vsub.f32 %v366, %v1669
        %1671 = vmatpush1.msra.mxu0 %v1670
        %1672 = vmatprep.subr.mxu0 0.0
        %v1673 = vand.u32 %v367, 4294901760
        %v1674 = vsub.f32 %v367, %v1673
        %1675 = vmatpush1.msra.mxu0 %v1674
        %1676 = vmatprep.subr.mxu0 0.0
        %v1677 = vand.u32 %v368, 4294901760
        %v1678 = vsub.f32 %v368, %v1677
        %1679 = vmatpush1.msra.mxu0 %v1678
        %1680 = vmatprep.subr.mxu0 0.0
        %1681 = vmatpush1.msra.mxu0 0.0
        %1682 = vmatprep.subr.mxu0 0.0
        %1683 = vmatpush1.msra.mxu0 0.0
        %1684 = vmatprep.subr.mxu0 0.0
        %1685 = vmatpush1.msra.mxu0 0.0
        %1686 = vmatprep.subr.mxu0 0.0
        %1687 = vmatpush1.msra.mxu0 0.0
        %1688 = vmatprep.subr.mxu0 0.0
        %1689 = vmatpush1.msra.mxu0 0.0
        %1690 = vmatprep.subr.mxu0 0.0
        %1691 = vmatpush1.msra.mxu0 0.0
        %1692 = vmatprep.subr.mxu0 0.0
        %1693 = vmatpush1.msra.mxu0 0.0
        %1694 = vmatprep.subr.mxu0 0.0
        %1695 = vmatpush1.msra.mxu0 0.0
        %1696 = vmatprep.subr.mxu0 0.0
        %1697 = vmatpush1.msra.mxu0 0.0
        %1698 = vmatprep.subr.mxu0 0.0
        %1699 = vmatpush1.msra.mxu0 0.0
        %1700 = vmatprep.subr.mxu0 0.0
        %1701 = vmatpush1.msra.mxu0 0.0
        %1702 = vmatprep.subr.mxu0 0.0
        %1703 = vmatpush1.msra.mxu0 0.0
        %1704 = vmatprep.subr.mxu0 0.0
        %1705 = vmatpush1.msra.mxu0 0.0
        %1706 = vmatprep.subr.mxu0 0.0
        %1707 = vmatpush1.msra.mxu0 0.0
        %1708 = vmatprep.subr.mxu0 0.0
        %1709 = vmatpush1.msra.mxu0 0.0
        %1710 = vmatprep.subr.mxu0 0.0
        %1711 = vmatpush1.msra.mxu0 0.0
        %1712 = vmatprep.mubr.f32.mxu0 0.0
        %v1713 = vand.u32 %v1322, 4294901760
        %v1714 = vsub.f32 %v1322, %v1713
        %1715 = vmatmul.mubr.f32.gmra.mrb[0].mxu0 %v1714
        %v1716 = vpop.f32.mrb[0].mxu0
        %v1717 = vadd.f32 %v1595, %v1716
        %v1718 = vpop.f32.mrb[0].mxu0
        %1719 = vmatprep.mubr.f32.mxu0 0.0
        %v1720 = vand.u32 %v1323, 4294901760
        %v1721 = vsub.f32 %v1323, %v1720
        %1722 = vmatmul.mubr.f32.gmra.mrb[0].mxu0 %v1721
        %v1723 = vpop.f32.mrb[0].mxu0
        %v1724 = vadd.f32 %v1601, %v1723
        %v1725 = vpop.f32.mrb[0].mxu0
        %1726 = vmatprep.mubr.f32.mxu0 0.0
        %v1727 = vand.u32 %v1324, 4294901760
        %v1728 = vsub.f32 %v1324, %v1727
        %1729 = vmatmul.mubr.f32.gmra.mrb[0].mxu0 %v1728
        %v1730 = vpop.f32.mrb[0].mxu0
        %v1731 = vadd.f32 %v1607, %v1730
        %v1732 = vpop.f32.mrb[0].mxu0
        %1733 = vmatprep.mubr.f32.mxu0 0.0
        %v1734 = vand.u32 %v1325, 4294901760
        %v1735 = vsub.f32 %v1325, %v1734
        %1736 = vmatmul.mubr.f32.gmra.mrb[0].mxu0 %v1735
        %v1737 = vpop.f32.mrb[0].mxu0
        %v1738 = vadd.f32 %v1613, %v1737
        %v1739 = vpop.f32.mrb[0].mxu0
        %1740 = vdwg.mxu0
        %1741 = vmatprep.subr.mxu0 0.0
        %v1742 = vand.u32 %v353, 4294901760
        %1743 = vmatpush1.msra.mxu0 %v1742
        %1744 = vmatprep.subr.mxu0 0.0
        %v1745 = vand.u32 %v354, 4294901760
        %1746 = vmatpush1.msra.mxu0 %v1745
        %1747 = vmatprep.subr.mxu0 0.0
        %v1748 = vand.u32 %v355, 4294901760
        %1749 = vmatpush1.msra.mxu0 %v1748
        %1750 = vmatprep.subr.mxu0 0.0
        %v1751 = vand.u32 %v356, 4294901760
        %1752 = vmatpush1.msra.mxu0 %v1751
        %1753 = vmatprep.subr.mxu0 0.0
        %v1754 = vand.u32 %v357, 4294901760
        %1755 = vmatpush1.msra.mxu0 %v1754
        %1756 = vmatprep.subr.mxu0 0.0
        %v1757 = vand.u32 %v358, 4294901760
        %1758 = vmatpush1.msra.mxu0 %v1757
        %1759 = vmatprep.subr.mxu0 0.0
        %v1760 = vand.u32 %v359, 4294901760
        %1761 = vmatpush1.msra.mxu0 %v1760
        %1762 = vmatprep.subr.mxu0 0.0
        %v1763 = vand.u32 %v360, 4294901760
        %1764 = vmatpush1.msra.mxu0 %v1763
        %1765 = vmatprep.subr.mxu0 0.0
        %v1766 = vand.u32 %v361, 4294901760
        %1767 = vmatpush1.msra.mxu0 %v1766
        %1768 = vmatprep.subr.mxu0 0.0
        %v1769 = vand.u32 %v362, 4294901760
        %1770 = vmatpush1.msra.mxu0 %v1769
        %1771 = vmatprep.subr.mxu0 0.0
        %v1772 = vand.u32 %v363, 4294901760
        %1773 = vmatpush1.msra.mxu0 %v1772
        %1774 = vmatprep.subr.mxu0 0.0
        %v1775 = vand.u32 %v364, 4294901760
        %1776 = vmatpush1.msra.mxu0 %v1775
        %1777 = vmatprep.subr.mxu0 0.0
        %v1778 = vand.u32 %v365, 4294901760
        %1779 = vmatpush1.msra.mxu0 %v1778
        %1780 = vmatprep.subr.mxu0 0.0
        %v1781 = vand.u32 %v366, 4294901760
        %1782 = vmatpush1.msra.mxu0 %v1781
        %1783 = vmatprep.subr.mxu0 0.0
        %v1784 = vand.u32 %v367, 4294901760
        %1785 = vmatpush1.msra.mxu0 %v1784
        %1786 = vmatprep.subr.mxu0 0.0
        %v1787 = vand.u32 %v368, 4294901760
        %1788 = vmatpush1.msra.mxu0 %v1787
        %1789 = vmatprep.subr.mxu0 0.0
        %1790 = vmatpush1.msra.mxu0 0.0
        %1791 = vmatprep.subr.mxu0 0.0
        %1792 = vmatpush1.msra.mxu0 0.0
        %1793 = vmatprep.subr.mxu0 0.0
        %1794 = vmatpush1.msra.mxu0 0.0
        %1795 = vmatprep.subr.mxu0 0.0
        %1796 = vmatpush1.msra.mxu0 0.0
        %1797 = vmatprep.subr.mxu0 0.0
        %1798 = vmatpush1.msra.mxu0 0.0
        %1799 = vmatprep.subr.mxu0 0.0
        %1800 = vmatpush1.msra.mxu0 0.0
        %1801 = vmatprep.subr.mxu0 0.0
        %1802 = vmatpush1.msra.mxu0 0.0
        %1803 = vmatprep.subr.mxu0 0.0
        %1804 = vmatpush1.msra.mxu0 0.0
        %1805 = vmatprep.subr.mxu0 0.0
        %1806 = vmatpush1.msra.mxu0 0.0
        %1807 = vmatprep.subr.mxu0 0.0
        %1808 = vmatpush1.msra.mxu0 0.0
        %1809 = vmatprep.subr.mxu0 0.0
        %1810 = vmatpush1.msra.mxu0 0.0
        %1811 = vmatprep.subr.mxu0 0.0
        %1812 = vmatpush1.msra.mxu0 0.0
        %1813 = vmatprep.subr.mxu0 0.0
        %1814 = vmatpush1.msra.mxu0 0.0
        %1815 = vmatprep.subr.mxu0 0.0
        %1816 = vmatpush1.msra.mxu0 0.0
        %1817 = vmatprep.subr.mxu0 0.0
        %1818 = vmatpush1.msra.mxu0 0.0
        %1819 = vmatprep.subr.mxu0 0.0
        %1820 = vmatpush1.msra.mxu0 0.0
        %1821 = vmatprep.mubr.f32.mxu0 0.0
        %v1822 = vand.u32 %v1322, 4294901760
        %v1823 = vsub.f32 %v1322, %v1822
        %v1824 = vand.u32 %v1823, 4294901760
        %1825 = vmatmul.mubr.f32.gmra.mrb[0].mxu0 %v1824
        %v1826 = vpop.f32.mrb[0].mxu0
        %v1827 = vadd.f32 %v1717, %v1826
        %v1828 = vpop.f32.mrb[0].mxu0
        %1829 = vmatprep.mubr.f32.mxu0 0.0
        %v1830 = vand.u32 %v1323, 4294901760
        %v1831 = vsub.f32 %v1323, %v1830
        %v1832 = vand.u32 %v1831, 4294901760
        %1833 = vmatmul.mubr.f32.gmra.mrb[0].mxu0 %v1832
        %v1834 = vpop.f32.mrb[0].mxu0
        %v1835 = vadd.f32 %v1724, %v1834
        %v1836 = vpop.f32.mrb[0].mxu0
        %1837 = vmatprep.mubr.f32.mxu0 0.0
        %v1838 = vand.u32 %v1324, 4294901760
        %v1839 = vsub.f32 %v1324, %v1838
        %v1840 = vand.u32 %v1839, 4294901760
        %1841 = vmatmul.mubr.f32.gmra.mrb[0].mxu0 %v1840
        %v1842 = vpop.f32.mrb[0].mxu0
        %v1843 = vadd.f32 %v1731, %v1842
        %v1844 = vpop.f32.mrb[0].mxu0
        %1845 = vmatprep.mubr.f32.mxu0 0.0
        %v1846 = vand.u32 %v1325, 4294901760
        %v1847 = vsub.f32 %v1325, %v1846
        %v1848 = vand.u32 %v1847, 4294901760
        %1849 = vmatmul.mubr.f32.gmra.mrb[0].mxu0 %v1848
        %v1850 = vpop.f32.mrb[0].mxu0
        %v1851 = vadd.f32 %v1738, %v1850
        %v1852 = vpop.f32.mrb[0].mxu0
        %1853 = vdwg.mxu0
        %1854 = vmatprep.subr.mxu0 0.0
        %v1855 = vand.u32 %v353, 4294901760
        %v1856 = vsub.f32 %v353, %v1855
        %v1857 = vand.u32 %v1856, 4294901760
        %1858 = vmatpush1.msra.mxu0 %v1857
        %1859 = vmatprep.subr.mxu0 0.0
        %v1860 = vand.u32 %v354, 4294901760
        %v1861 = vsub.f32 %v354, %v1860
        %v1862 = vand.u32 %v1861, 4294901760
        %1863 = vmatpush1.msra.mxu0 %v1862
        %1864 = vmatprep.subr.mxu0 0.0
        %v1865 = vand.u32 %v355, 4294901760
        %v1866 = vsub.f32 %v355, %v1865
        %v1867 = vand.u32 %v1866, 4294901760
        %1868 = vmatpush1.msra.mxu0 %v1867
        %1869 = vmatprep.subr.mxu0 0.0
        %v1870 = vand.u32 %v356, 4294901760
        %v1871 = vsub.f32 %v356, %v1870
        %v1872 = vand.u32 %v1871, 4294901760
        %1873 = vmatpush1.msra.mxu0 %v1872
        %1874 = vmatprep.subr.mxu0 0.0
        %v1875 = vand.u32 %v357, 4294901760
        %v1876 = vsub.f32 %v357, %v1875
        %v1877 = vand.u32 %v1876, 4294901760
        %1878 = vmatpush1.msra.mxu0 %v1877
        %1879 = vmatprep.subr.mxu0 0.0
        %v1880 = vand.u32 %v358, 4294901760
        %v1881 = vsub.f32 %v358, %v1880
        %v1882 = vand.u32 %v1881, 4294901760
        %1883 = vmatpush1.msra.mxu0 %v1882
        %1884 = vmatprep.subr.mxu0 0.0
        %v1885 = vand.u32 %v359, 4294901760
        %v1886 = vsub.f32 %v359, %v1885
        %v1887 = vand.u32 %v1886, 4294901760
        %1888 = vmatpush1.msra.mxu0 %v1887
        %1889 = vmatprep.subr.mxu0 0.0
        %v1890 = vand.u32 %v360, 4294901760
        %v1891 = vsub.f32 %v360, %v1890
        %v1892 = vand.u32 %v1891, 4294901760
        %1893 = vmatpush1.msra.mxu0 %v1892
        %1894 = vmatprep.subr.mxu0 0.0
        %v1895 = vand.u32 %v361, 4294901760
        %v1896 = vsub.f32 %v361, %v1895
        %v1897 = vand.u32 %v1896, 4294901760
        %1898 = vmatpush1.msra.mxu0 %v1897
        %1899 = vmatprep.subr.mxu0 0.0
        %v1900 = vand.u32 %v362, 4294901760
        %v1901 = vsub.f32 %v362, %v1900
        %v1902 = vand.u32 %v1901, 4294901760
        %1903 = vmatpush1.msra.mxu0 %v1902
        %1904 = vmatprep.subr.mxu0 0.0
        %v1905 = vand.u32 %v363, 4294901760
        %v1906 = vsub.f32 %v363, %v1905
        %v1907 = vand.u32 %v1906, 4294901760
        %1908 = vmatpush1.msra.mxu0 %v1907
        %1909 = vmatprep.subr.mxu0 0.0
        %v1910 = vand.u32 %v364, 4294901760
        %v1911 = vsub.f32 %v364, %v1910
        %v1912 = vand.u32 %v1911, 4294901760
        %1913 = vmatpush1.msra.mxu0 %v1912
        %1914 = vmatprep.subr.mxu0 0.0
        %v1915 = vand.u32 %v365, 4294901760
        %v1916 = vsub.f32 %v365, %v1915
        %v1917 = vand.u32 %v1916, 4294901760
        %1918 = vmatpush1.msra.mxu0 %v1917
        %1919 = vmatprep.subr.mxu0 0.0
        %v1920 = vand.u32 %v366, 4294901760
        %v1921 = vsub.f32 %v366, %v1920
        %v1922 = vand.u32 %v1921, 4294901760
        %1923 = vmatpush1.msra.mxu0 %v1922
        %1924 = vmatprep.subr.mxu0 0.0
        %v1925 = vand.u32 %v367, 4294901760
        %v1926 = vsub.f32 %v367, %v1925
        %v1927 = vand.u32 %v1926, 4294901760
        %1928 = vmatpush1.msra.mxu0 %v1927
        %1929 = vmatprep.subr.mxu0 0.0
        %v1930 = vand.u32 %v368, 4294901760
        %v1931 = vsub.f32 %v368, %v1930
        %v1932 = vand.u32 %v1931, 4294901760
        %1933 = vmatpush1.msra.mxu0 %v1932
        %1934 = vmatprep.subr.mxu0 0.0
        %1935 = vmatpush1.msra.mxu0 0.0
        %1936 = vmatprep.subr.mxu0 0.0
        %1937 = vmatpush1.msra.mxu0 0.0
        %1938 = vmatprep.subr.mxu0 0.0
        %1939 = vmatpush1.msra.mxu0 0.0
        %1940 = vmatprep.subr.mxu0 0.0
        %1941 = vmatpush1.msra.mxu0 0.0
        %1942 = vmatprep.subr.mxu0 0.0
        %1943 = vmatpush1.msra.mxu0 0.0
        %1944 = vmatprep.subr.mxu0 0.0
        %1945 = vmatpush1.msra.mxu0 0.0
        %1946 = vmatprep.subr.mxu0 0.0
        %1947 = vmatpush1.msra.mxu0 0.0
        %1948 = vmatprep.subr.mxu0 0.0
        %1949 = vmatpush1.msra.mxu0 0.0
        %1950 = vmatprep.subr.mxu0 0.0
        %1951 = vmatpush1.msra.mxu0 0.0
        %1952 = vmatprep.subr.mxu0 0.0
        %1953 = vmatpush1.msra.mxu0 0.0
        %1954 = vmatprep.subr.mxu0 0.0
        %1955 = vmatpush1.msra.mxu0 0.0
        %1956 = vmatprep.subr.mxu0 0.0
        %1957 = vmatpush1.msra.mxu0 0.0
        %1958 = vmatprep.subr.mxu0 0.0
        %1959 = vmatpush1.msra.mxu0 0.0
        %1960 = vmatprep.subr.mxu0 0.0
        %1961 = vmatpush1.msra.mxu0 0.0
        %1962 = vmatprep.subr.mxu0 0.0
        %1963 = vmatpush1.msra.mxu0 0.0
        %1964 = vmatprep.subr.mxu0 0.0
        %1965 = vmatpush1.msra.mxu0 0.0
        %1966 = vmatprep.mubr.f32.mxu0 0.0
        %v1967 = vand.u32 %v1322, 4294901760
        %1968 = vmatmul.mubr.f32.gmra.mrb[0].mxu0 %v1967
        %v1969 = vpop.f32.mrb[0].mxu0
        %v1970 = vadd.f32 %v1827, %v1969
        %v1971 = vpop.f32.mrb[0].mxu0
        %1972 = vmatprep.mubr.f32.mxu0 0.0
        %v1973 = vand.u32 %v1323, 4294901760
        %1974 = vmatmul.mubr.f32.gmra.mrb[0].mxu0 %v1973
        %v1975 = vpop.f32.mrb[0].mxu0
        %v1976 = vadd.f32 %v1835, %v1975
        %v1977 = vpop.f32.mrb[0].mxu0
        %1978 = vmatprep.mubr.f32.mxu0 0.0
        %v1979 = vand.u32 %v1324, 4294901760
        %1980 = vmatmul.mubr.f32.gmra.mrb[0].mxu0 %v1979
        %v1981 = vpop.f32.mrb[0].mxu0
        %v1982 = vadd.f32 %v1843, %v1981
        %v1983 = vpop.f32.mrb[0].mxu0
        %1984 = vmatprep.mubr.f32.mxu0 0.0
        %v1985 = vand.u32 %v1325, 4294901760
        %1986 = vmatmul.mubr.f32.gmra.mrb[0].mxu0 %v1985
        %v1987 = vpop.f32.mrb[0].mxu0
        %v1988 = vadd.f32 %v1851, %v1987
        %v1989 = vpop.f32.mrb[0].mxu0
        %1990 = vdwg.mxu0
        %1991 = vmatprep.subr.mxu0 0.0
        %v1992 = vand.u32 %v353, 4294901760
        %1993 = vmatpush1.msra.mxu0 %v1992
        %1994 = vmatprep.subr.mxu0 0.0
        %v1995 = vand.u32 %v354, 4294901760
        %1996 = vmatpush1.msra.mxu0 %v1995
        %1997 = vmatprep.subr.mxu0 0.0
        %v1998 = vand.u32 %v355, 4294901760
        %1999 = vmatpush1.msra.mxu0 %v1998
        %2000 = vmatprep.subr.mxu0 0.0
        %v2001 = vand.u32 %v356, 4294901760
        %2002 = vmatpush1.msra.mxu0 %v2001
        %2003 = vmatprep.subr.mxu0 0.0
        %v2004 = vand.u32 %v357, 4294901760
        %2005 = vmatpush1.msra.mxu0 %v2004
        %2006 = vmatprep.subr.mxu0 0.0
        %v2007 = vand.u32 %v358, 4294901760
        %2008 = vmatpush1.msra.mxu0 %v2007
        %2009 = vmatprep.subr.mxu0 0.0
        %v2010 = vand.u32 %v359, 4294901760
        %2011 = vmatpush1.msra.mxu0 %v2010
        %2012 = vmatprep.subr.mxu0 0.0
        %v2013 = vand.u32 %v360, 4294901760
        %2014 = vmatpush1.msra.mxu0 %v2013
        %2015 = vmatprep.subr.mxu0 0.0
        %v2016 = vand.u32 %v361, 4294901760
        %2017 = vmatpush1.msra.mxu0 %v2016
        %2018 = vmatprep.subr.mxu0 0.0
        %v2019 = vand.u32 %v362, 4294901760
        %2020 = vmatpush1.msra.mxu0 %v2019
        %2021 = vmatprep.subr.mxu0 0.0
        %v2022 = vand.u32 %v363, 4294901760
        %2023 = vmatpush1.msra.mxu0 %v2022
        %2024 = vmatprep.subr.mxu0 0.0
        %v2025 = vand.u32 %v364, 4294901760
        %2026 = vmatpush1.msra.mxu0 %v2025
        %2027 = vmatprep.subr.mxu0 0.0
        %v2028 = vand.u32 %v365, 4294901760
        %2029 = vmatpush1.msra.mxu0 %v2028
        %2030 = vmatprep.subr.mxu0 0.0
        %v2031 = vand.u32 %v366, 4294901760
        %2032 = vmatpush1.msra.mxu0 %v2031
        %2033 = vmatprep.subr.mxu0 0.0
        %v2034 = vand.u32 %v367, 4294901760
        %2035 = vmatpush1.msra.mxu0 %v2034
        %2036 = vmatprep.subr.mxu0 0.0
        %v2037 = vand.u32 %v368, 4294901760
        %2038 = vmatpush1.msra.mxu0 %v2037
        %2039 = vmatprep.subr.mxu0 0.0
        %2040 = vmatpush1.msra.mxu0 0.0
        %2041 = vmatprep.subr.mxu0 0.0
        %2042 = vmatpush1.msra.mxu0 0.0
        %2043 = vmatprep.subr.mxu0 0.0
        %2044 = vmatpush1.msra.mxu0 0.0
        %2045 = vmatprep.subr.mxu0 0.0
        %2046 = vmatpush1.msra.mxu0 0.0
        %2047 = vmatprep.subr.mxu0 0.0
        %2048 = vmatpush1.msra.mxu0 0.0
        %2049 = vmatprep.subr.mxu0 0.0
        %2050 = vmatpush1.msra.mxu0 0.0
        %2051 = vmatprep.subr.mxu0 0.0
        %2052 = vmatpush1.msra.mxu0 0.0
        %2053 = vmatprep.subr.mxu0 0.0
        %2054 = vmatpush1.msra.mxu0 0.0
        %2055 = vmatprep.subr.mxu0 0.0
        %2056 = vmatpush1.msra.mxu0 0.0
        %2057 = vmatprep.subr.mxu0 0.0
        %2058 = vmatpush1.msra.mxu0 0.0
        %2059 = vmatprep.subr.mxu0 0.0
        %2060 = vmatpush1.msra.mxu0 0.0
        %2061 = vmatprep.subr.mxu0 0.0
        %2062 = vmatpush1.msra.mxu0 0.0
        %2063 = vmatprep.subr.mxu0 0.0
        %2064 = vmatpush1.msra.mxu0 0.0
        %2065 = vmatprep.subr.mxu0 0.0
        %2066 = vmatpush1.msra.mxu0 0.0
        %2067 = vmatprep.subr.mxu0 0.0
        %2068 = vmatpush1.msra.mxu0 0.0
        %2069 = vmatprep.subr.mxu0 0.0
        %2070 = vmatpush1.msra.mxu0 0.0
        %2071 = vmatprep.mubr.f32.mxu0 0.0
        %v2072 = vand.u32 %v1322, 4294901760
        %2073 = vmatmul.mubr.f32.gmra.mrb[0].mxu0 %v2072
        %v2074 = vpop.f32.mrb[0].mxu0
        %v2075 = vadd.f32 %v1970, %v2074
        %v2076 = vpop.f32.mrb[0].mxu0
        %2077 = vmatprep.mubr.f32.mxu0 0.0
        %v2078 = vand.u32 %v1323, 4294901760
        %2079 = vmatmul.mubr.f32.gmra.mrb[0].mxu0 %v2078
        %v2080 = vpop.f32.mrb[0].mxu0
        %v2081 = vadd.f32 %v1976, %v2080
        %v2082 = vpop.f32.mrb[0].mxu0
        %2083 = vmatprep.mubr.f32.mxu0 0.0
        %v2084 = vand.u32 %v1324, 4294901760
        %2085 = vmatmul.mubr.f32.gmra.mrb[0].mxu0 %v2084
        %v2086 = vpop.f32.mrb[0].mxu0
        %v2087 = vadd.f32 %v1982, %v2086
        %v2088 = vpop.f32.mrb[0].mxu0
        %2089 = vmatprep.mubr.f32.mxu0 0.0
        %v2090 = vand.u32 %v1325, 4294901760
        %2091 = vmatmul.mubr.f32.gmra.mrb[0].mxu0 %v2090
        %v2092 = vpop.f32.mrb[0].mxu0
        %v2093 = vadd.f32 %v1988, %v2092
        %v2094 = vpop.f32.mrb[0].mxu0
        %2095 = vdwg.mxu0
        %v2096 = vsub.f32 %v343, %v2075
        %v2097 = vsub.f32 %v344, %v2081
        %v2098 = vsub.f32 %v345, %v2087
        %v2099 = vsub.f32 %v346, %v2093
        %v2100 = vmul.f32 %v2096, %v2096
        %v2101 = vmul.f32 %v2097, %v2097
        %v2102 = vmul.f32 %v2098, %v2098
        %v2103 = vmul.f32 %v2099, %v2099
        %v2104 = vsel %vm371, %v2100, 0.0
        %2105 = vadd.xlane.f32.xlu0 %v2104
        %v2106 = vpop.xlane.xlu0 %2105
        %v2107 = vsel %vm371, %v2101, 0.0
        %2108 = vadd.xlane.f32.xlu0 %v2107
        %v2109 = vpop.xlane.xlu0 %2108
        %v2110 = vsel %vm371, %v2102, 0.0
        %2111 = vadd.xlane.f32.xlu0 %v2110
        %v2112 = vpop.xlane.xlu0 %2111
        %v2113 = vsel %vm371, %v2103, 0.0
        %2114 = vadd.xlane.f32.xlu0 %v2113
        %v2115 = vpop.xlane.xlu0 %2114
        %2116 = vst.msk [vmem:[#allocation2] sm:$0xff] %vm371, %v2096
        %2117 = vst.msk [vmem:[#allocation2 + $0x8] sm:$0xff] %vm371, %v2097
        %2118 = vst.msk [vmem:[#allocation2 + $0x10] sm:$0xff] %vm371, %v2098
        %2119 = vst.msk [vmem:[#allocation2 + $0x18] sm:$0xff] %vm371, %v2099
        %vm2120 = vcmask 7168
        %2121 = vst.msk [vmem:[#allocation3] sm:$0xff] %vm2120, %v2106
        %2122 = vst.msk [vmem:[#allocation3 + $0x8] sm:$0xff] %vm2120, %v2109
        %2123 = vst.msk [vmem:[#allocation3 + $0x10] sm:$0xff] %vm2120, %v2112
        %2124 = vst.msk [vmem:[#allocation3 + $0x18] sm:$0xff] %vm2120, %v2115
        %v2125 = vld [vmem:[%s296] sm:$0xff]
        %v2126 = vld [vmem:[%s296 + $0x8] sm:$0xff]
        %v2127 = vld [vmem:[%s296 + $0x10] sm:$0xff]
        %v2128 = vld [vmem:[%s296 + $0x18] sm:$0xff]
        %v2129 = vadd.f32 %v2125, %v2106
        %v2130 = vadd.f32 %v2126, %v2109
        %v2131 = vadd.f32 %v2127, %v2112
        %v2132 = vadd.f32 %v2128, %v2115
        %2133 = vst.msk [vmem:[%s296] sm:$0xff] %vm2120, %v2129
        %2134 = vst.msk [vmem:[%s296 + $0x8] sm:$0xff] %vm2120, %v2130
        %2135 = vst.msk [vmem:[%s296 + $0x10] sm:$0xff] %vm2120, %v2131
        %2136 = vst.msk [vmem:[%s296 + $0x18] sm:$0xff] %vm2120, %v2132
        %v2137 = vstv %s29
        %vm2138 = vcmp.eq.s32.totalorder %v1249, %v2137
        %v2139 = vld [vmem:[%s302] sm:$0xff]
        %v2140 = vld [vmem:[%s302 + $0x8] sm:$0xff]
        %v2141 = vld [vmem:[%s302 + $0x10] sm:$0xff]
        %v2142 = vld [vmem:[%s302 + $0x18] sm:$0xff]
        %v2143 = vsel %vm2138, %v1271, %v2139
        %v2144 = vsel %vm2138, %v1285, %v2140
        %v2145 = vsel %vm2138, %v1299, %v2141
        %v2146 = vsel %vm2138, %v1313, %v2142
        %vm2147 = vcmask 23552
        %2148 = vst.msk [vmem:[%s302] sm:$0xff] %vm2147, %v2143
        %2149 = vst.msk [vmem:[%s302 + $0x8] sm:$0xff] %vm2147, %v2144
        %2150 = vst.msk [vmem:[%s302 + $0x10] sm:$0xff] %vm2147, %v2145
        %2151 = vst.msk [vmem:[%s302 + $0x18] sm:$0xff] %vm2147, %v2146
        %2152 = vst [vmem:[%s284] sm:$0xff] %v1236
        %2153 = vst [vmem:[%s284 + $0x8] sm:$0xff] %v1237
        %2154 = vst [vmem:[%s284 + $0x10] sm:$0xff] %v1238
        %2155 = vst [vmem:[%s284 + $0x18] sm:$0xff] %v1239
        %p2156 = scmp.eq.s32.totalorder %s29, 2
        // Predicated region
        $region37: #{tpu_custom_call.1} parent=31 // pred_check
          %p2157 = pneg %p2156
        $region38: #{tpu_custom_call.1} parent=31 // pred_check_branch
          %2159 = sbr.rel (%p2157) target = $region40
        $region39: #{tpu_custom_call.1} parent=31 // pred_region
          %v2160 = vld [vmem:[%s289] sm:$0xff]
          %v2161 = vld [vmem:[%s289 + $0x8] sm:$0xff]
          %v2162 = vld [vmem:[%s289 + $0x10] sm:$0xff]
          %v2163 = vld [vmem:[%s289 + $0x18] sm:$0xff]
          %v2164 = vsub.f32 %v2160, %v2096
          %v2165 = vsub.f32 %v2161, %v2097
          %v2166 = vsub.f32 %v2162, %v2098
          %v2167 = vsub.f32 %v2163, %v2099
          %2168 = vst.msk [vmem:[%s263] sm:$0xff] %vm371, %v2164
          %2169 = vst.msk [vmem:[%s263 + $0x8] sm:$0xff] %vm371, %v2165
          %2170 = vst.msk [vmem:[%s263 + $0x10] sm:$0xff] %vm371, %v2166
          %2171 = vst.msk [vmem:[%s263 + $0x18] sm:$0xff] %vm371, %v2167
        $region40: #{tpu_custom_call.1} parent=31 // pred_fallthru
          _
        %s2172 = sand.u32 %s112, 1
        %s2173 = scalar_lea.sflag [#allocation5], %s2172
        %s2174 = sand.u32 %s112, 1
        %s2175 = smul.addr %s2174, 32
        %s2176 = scalar_lea.vmem [#allocation4], %s2175
        %s2177 = smul.u32 4, %s28
        %p2178 = scmp.lt.s32.totalorder %s2177, 7
        %s2179 = scalar_select %p2178, %s2177, 7
        %s2180 = smul.addr %s2179, 8
        %s2181 = scalar_lea.vmem %s4, %s2180
        %s2182 = smul.u32 4, %s28
        %p2183 = scmp.lt.s32.totalorder %s2182, 7
        %s2184 = scalar_select %p2183, %s2182, 7
        %s2185 = smul.addr %s2184, 8
        %s2186 = scalar_lea.vmem %s5, %s2185
        %s2187 = sand.u32 %s192, 1
        %s2188 = scalar_lea.sflag [#allocation7], %s2187
        %s2189 = sand.u32 %s192, 1
        %s2190 = smul.addr %s2189, 32
        %s2191 = scalar_lea.vmem [#allocation6], %s2190
        // Predicated region
        $region41: #{tpu_custom_call.1} parent=31 // pred_check
          %p2192 = pneg %p122
        $region42: #{tpu_custom_call.1} parent=31 // pred_check_branch
          %2194 = sbr.rel (%p2192) target = $region44
        $region43: #{tpu_custom_call.1} parent=31 // pred_region
          %s2195 = smul.u32 4, %s28
          %s2197 = ssub.s32 512, 512
          %2198 = vsyncadd %s2173, %s2197
          %s2199 = smul.addr %s2195, 128
          %s2200 = scalar_lea.hbm %s3, %s2199
          %s2201 = sshll.u32 %s2176, 4
          %s2202 = int_to_ptr.vmem [resolvable:$true] %s2201
          %2207 = dma.vmem_to_hbm [thread:$0]  %s2202, 512, %s2200, %s2173, 128, 128, 8
        $region44: #{tpu_custom_call.1} parent=31 // pred_fallthru
          _
        // Predicated region
        $region45: #{tpu_custom_call.1} parent=31 // pred_check
          %p2208 = pneg %p148
        $region46: #{tpu_custom_call.1} parent=31 // pred_check_branch
          %2210 = sbr.rel (%p2208) target = $region48
        $region47: #{tpu_custom_call.1} parent=31 // pred_region
          %s2211 = smul.u32 4, %s28
        $region48: #{tpu_custom_call.1} parent=31 // pred_fallthru
          _
        // Predicated region
        $region49: #{tpu_custom_call.1} parent=31 // pred_check
          %p2212 = pneg %p174
        $region50: #{tpu_custom_call.1} parent=31 // pred_check_branch
          %2214 = sbr.rel (%p2212) target = $region52
        $region51: #{tpu_custom_call.1} parent=31 // pred_region
          %s2215 = smul.u32 4, %s28
        $region52: #{tpu_custom_call.1} parent=31 // pred_fallthru
          _
        // Predicated region
        $region53: #{tpu_custom_call.1} parent=31 // pred_check
          %p2216 = pneg %p202
        $region54: #{tpu_custom_call.1} parent=31 // pred_check_branch
          %2218 = sbr.rel (%p2216) target = $region56
        $region55: #{tpu_custom_call.1} parent=31 // pred_region
          %s2219 = smul.u32 4, %s28
          %s2221 = ssub.s32 512, 512
          %2222 = vsyncadd %s2188, %s2221
          %s2223 = smul.addr %s2219, 3
          %s2224 = sadd.s32 %s29, %s2223
          %s2225 = smul.addr %s2224, 128
          %s2226 = scalar_lea.hbm %s6, %s2225
          %s2227 = sshll.u32 %s2191, 4
          %s2228 = int_to_ptr.vmem [resolvable:$true] %s2227
          %2233 = dma.vmem_to_hbm [thread:$0]  %s2228, 512, %s2226, %s2188, 128, 384, 8
        $region56: #{tpu_custom_call.1} parent=31 // pred_fallthru
          _
      $region32: #{tpu_custom_call.1} parent=5 // pred_fallthru
        _
      %p2234 = scmp.le.s32.totalorder 2, %s19
      // Predicated region
      $region57: #{tpu_custom_call.1} parent=5 // pred_check
        %p2235 = pneg %p2234
      $region58: #{tpu_custom_call.1} parent=5 // pred_check_branch
        %2237 = sbr.rel (%p2235) target = $region60
      $region59: #{tpu_custom_call.1} parent=5 // pred_region
        %s2238 = ssub.s32 %s19, 2
        // Predicated region
        $region61: #{tpu_custom_call.1} parent=59 // pred_check
          %p2239 = pneg %p128
        $region62: #{tpu_custom_call.1} parent=59 // pred_check_branch
          %2241 = sbr.rel (%p2239) target = $region64
        $region63: #{tpu_custom_call.1} parent=59 // pred_region
          %s2242 = sand.u32 %s113, 1
          %s2243 = scalar_lea.sflag [#allocation5], %s2242
          %s2244 = sand.u32 %s113, 1
          %s2245 = smul.addr %s2244, 32
          %s2246 = scalar_lea.vmem [#allocation4], %s2245
          %2247 = dma.done %s2243, 512
        $region64: #{tpu_custom_call.1} parent=59 // pred_fallthru
          _
        // Predicated region
        $region65: #{tpu_custom_call.1} parent=59 // pred_check
          %p2248 = pneg %p154
        $region66: #{tpu_custom_call.1} parent=59 // pred_check_branch
          %2250 = sbr.rel (%p2248) target = $region68
        $region67: #{tpu_custom_call.1} parent=59 // pred_region
          %s2251 = smul.u32 4, %s30
          %p2252 = scmp.lt.s32.totalorder %s2251, 7
          %s2253 = scalar_select %p2252, %s2251, 7
          %s2254 = smul.addr %s2253, 8
          %s2255 = scalar_lea.vmem %s4, %s2254
        $region68: #{tpu_custom_call.1} parent=59 // pred_fallthru
          _
        // Predicated region
        $region69: #{tpu_custom_call.1} parent=59 // pred_check
          %p2256 = pneg %p180
        $region70: #{tpu_custom_call.1} parent=59 // pred_check_branch
          %2258 = sbr.rel (%p2256) target = $region72
        $region71: #{tpu_custom_call.1} parent=59 // pred_region
          %s2259 = smul.u32 4, %s30
          %p2260 = scmp.lt.s32.totalorder %s2259, 7
          %s2261 = scalar_select %p2260, %s2259, 7
          %s2262 = smul.addr %s2261, 8
          %s2263 = scalar_lea.vmem %s5, %s2262
        $region72: #{tpu_custom_call.1} parent=59 // pred_fallthru
          _
        // Predicated region
        $region73: #{tpu_custom_call.1} parent=59 // pred_check
          %p2264 = pneg %p208
        $region74: #{tpu_custom_call.1} parent=59 // pred_check_branch
          %2266 = sbr.rel (%p2264) target = $region76
        $region75: #{tpu_custom_call.1} parent=59 // pred_region
          %s2267 = sand.u32 %s193, 1
          %s2268 = scalar_lea.sflag [#allocation7], %s2267
          %s2269 = sand.u32 %s193, 1
          %s2270 = smul.addr %s2269, 32
          %s2271 = scalar_lea.vmem [#allocation6], %s2270
          %2272 = dma.done %s2268, 512
        $region76: #{tpu_custom_call.1} parent=59 // pred_fallthru
          _
      $region60: #{tpu_custom_call.1} parent=5 // pred_fallthru
        _
    $region6: #{tpu_custom_call.1} parent=1 // loop_footer
      %s23 = sadd.s32 1, %s19
    $region7: #{tpu_custom_call.1} parent=1 // loop_footer_branch
      %18 = sbr.rel target = $region3
    $region8: #{tpu_custom_call.1} parent=1 // loop_exit
      _
    %2273 = vsyncpa [#allocation5], 1
    %s2274 = scalar_lea.sflag [#allocation5], 1
    %2275 = vsyncpa %s2274, 1
    %2276 = vsyncpa [#allocation7], 1
    %s2277 = scalar_lea.sflag [#allocation7], 1
    %2278 = vsyncpa %s2277, 1

</llo_original>
